<compile_context>
chip_gen: v7x
topology: tpu7x:2x2x1
jax: 0.10.0
libtpu: 0.0.40
codegen_flags: <defaults>
</compile_context>

<pallas_src>
import math

import jax
import jax.numpy as jnp
from jax.experimental import pallas as pl
from jax.experimental.pallas import tpu as pltpu


# ---------------------------------------------------------------------------
# Pallas kernel: whole sequence in VMEM, single invocation (no grid).
# ---------------------------------------------------------------------------
def _lstm_ad_kernel(x_ref, w_ih_ref, w_hh_ref, w_fc_ref, b_g_ref, b_fc_ref,
                    h0_ref, c0_ref, out_ref, gates_ref, hseq_ref):
    T, F = x_ref.shape

    # Loop-invariant parameters hoisted once (tiny; stay in vregs).
    w_hh = w_hh_ref[...]                 # (F, 4F), gate cols ordered [i|f|o|g]
    b_fc = b_fc_ref[...]                 # (1, F)

    # Input contribution for every timestep in ONE matmul (b_ih+b_hh folded).
    gates_ref[...] = (
        jnp.dot(x_ref[...], w_ih_ref[...], preferred_element_type=jnp.float32)
        + b_g_ref[...]
    )

    def step(t, carry):
        h, c = carry
        g = gates_ref[pl.ds(t, 1), :] + jnp.dot(
            h, w_hh, preferred_element_type=jnp.float32
        )                                                    # (1, 4F)
        # Gate columns reordered wrapper-side to [i, f, o | g]: one sigmoid
        # over a contiguous 3F slice + one tanh over F per step.
        sig = jax.nn.sigmoid(g[:, 0:3 * F])
        gg = jnp.tanh(g[:, 3 * F:4 * F])
        i = sig[:, 0 * F:1 * F]
        f = sig[:, 1 * F:2 * F]
        o = sig[:, 2 * F:3 * F]
        c_new = f * c + i * gg
        h_new = o * jnp.tanh(c_new)
        hseq_ref[pl.ds(t, 1), :] = h_new
        return (h_new, c_new)

    # Unrolled recurrence: full unroll for small static T, partial for long T.
    jax.lax.fori_loop(
        0, T, step, (h0_ref[...], c0_ref[...]),
        unroll=True if T <= 128 else 8,
    )

    # Output head (Linear + Sigmoid, then *2) over the full hidden slab.
    y = jnp.dot(hseq_ref[...], w_fc_ref[...],
                preferred_element_type=jnp.float32) + b_fc
    out_ref[...] = 2.0 * jax.nn.sigmoid(y)


# ---------------------------------------------------------------------------
# Wrapper: reorder gate columns, pass separate tile-friendly refs, no grid.
# ---------------------------------------------------------------------------
def _reorder_gate_cols(a, F):
    # PyTorch LSTM gate order on the 4F axis is [i | f | g | o]; reorder to
    # [i | f | o | g] so the kernel does one contiguous sigmoid + one tanh.
    return jnp.concatenate(
        [a[..., 0:2 * F], a[..., 3 * F:4 * F], a[..., 2 * F:3 * F]], axis=-1
    )


def lstm_ad_forward(x, params, h0, c0):
    T, F = x.shape
    w_ih = _reorder_gate_cols(params["w_ih_t"], F)     # (F, 4F)
    w_hh = _reorder_gate_cols(params["w_hh_t"], F)     # (F, 4F)
    b_g = _reorder_gate_cols(params["b_g"], F)         # (1, 4F)
    w_fc = params["w_fc_t"]                            # (F, F)
    b_fc = params["b_fc"]                              # (1, F)

    vmem_specs = [
        pl.BlockSpec(memory_space=pltpu.MemorySpace.VMEM) for _ in range(8)
    ]
    return pl.pallas_call(
        _lstm_ad_kernel,
        out_shape=jax.ShapeDtypeStruct((T, F), jnp.float32),
        # No grid: single invocation, whole arrays resident in VMEM,
        # single-buffered (no useless double-buffering / pipeline prologue).
        in_specs=vmem_specs,
        out_specs=pl.BlockSpec(memory_space=pltpu.MemorySpace.VMEM),
        scratch_shapes=[
            pltpu.VMEM((T, 4 * F), jnp.float32),   # per-step input-gate slab
            pltpu.VMEM((T, F), jnp.float32),       # hidden-state history
        ],
        compiler_params=pltpu.CompilerParams(
            vmem_limit_bytes=32 * 1024 * 1024,     # headroom for longer T (v5e)
        ),
    )(x, w_ih, w_hh, w_fc, b_g, b_fc, h0, c0)


# ---------------------------------------------------------------------------
# Pure-JAX reference (same math, PyTorch gate order) for correctness checking.
# This also validates that the wrapper-side [i,f,o|g] reordering is consistent.
# ---------------------------------------------------------------------------
def lstm_ad_reference(x, params, h0, c0):
    F = x.shape[-1]
    w_ih, w_hh = params["w_ih_t"], params["w_hh_t"]
    b_g = params["b_g"]

    def step(carry, xt):
        h, c = carry
        g = xt[None, :] @ w_ih + h @ w_hh + b_g
        i = jax.nn.sigmoid(g[:, 0 * F:1 * F])
        f = jax.nn.sigmoid(g[:, 1 * F:2 * F])
        gg = jnp.tanh(g[:, 2 * F:3 * F])
        o = jax.nn.sigmoid(g[:, 3 * F:4 * F])
        c = f * c + i * gg
        h = o * jnp.tanh(c)
        return (h, c), h[0]

    _, hseq = jax.lax.scan(step, (h0, c0), x)
    y = hseq @ params["w_fc_t"] + params["b_fc"]
    return 2.0 * jax.nn.sigmoid(y)


# ---------------------------------------------------------------------------
# Deterministic parameter construction (PyTorch-style uniform init,
# standard PyTorch gate order [i | f | g | o] on the 4F axis).
# ---------------------------------------------------------------------------
def init_params(key, feats):
    F = feats
    k = jax.random.split(key, 6)
    bound = 1.0 / math.sqrt(F)

    def u(kk, shape):
        return jax.random.uniform(kk, shape, jnp.float32, -bound, bound)

    return {
        "w_ih_t": u(k[0], (F, 4 * F)),                # nn.LSTM weight_ih, transposed
        "w_hh_t": u(k[1], (F, 4 * F)),                # nn.LSTM weight_hh, transposed
        "b_g": u(k[2], (1, 4 * F)) + u(k[3], (1, 4 * F)),  # b_ih + b_hh folded
        "w_fc_t": u(k[4], (F, F)),                    # nn.Linear weight, transposed
        "b_fc": u(k[5], (1, F)),
    }


if __name__ == "__main__":
    feats, seq_len = 8, 16
    key = jax.random.PRNGKey(0)
    k_x, k_p, k_h, k_c = jax.random.split(key, 4)

    x = jax.random.normal(k_x, (seq_len, feats), jnp.float32)
    params = init_params(k_p, feats)
    # Matches hidden2 = (rand(1,1,F), randn(1,1,F)) but deterministic / float32.
    h0 = jax.random.uniform(k_h, (1, feats), jnp.float32)
    c0 = jax.random.normal(k_c, (1, feats), jnp.float32)

    out = jax.block_until_ready(lstm_ad_forward(x, params, h0, c0))
    ref = lstm_ad_reference(x, params, h0, c0)

    assert out.shape == (seq_len, feats)
    assert bool(jnp.all(jnp.isfinite(out)))
    assert bool(jnp.allclose(out, ref, atol=1e-5, rtol=1e-5))
    print("KERNEL_OK")
</pallas_src>

<mosaic_0001>
module attributes {stable_mosaic.version = 11 : i64} {
  func.func @_lstm_ad_kernel(%arg0: memref<16x8xf32, #tpu.memory_space<vmem>>, %arg1: memref<8x32xf32, #tpu.memory_space<vmem>>, %arg2: memref<8x32xf32, #tpu.memory_space<vmem>>, %arg3: memref<8x8xf32, #tpu.memory_space<vmem>>, %arg4: memref<1x32xf32, #tpu.memory_space<vmem>>, %arg5: memref<1x8xf32, #tpu.memory_space<vmem>>, %arg6: memref<1x8xf32, #tpu.memory_space<vmem>>, %arg7: memref<1x8xf32, #tpu.memory_space<vmem>>, %arg8: memref<16x8xf32, #tpu.memory_space<vmem>>, %arg9: memref<16x32xf32, #tpu.memory_space<vmem>>, %arg10: memref<16x8xf32, #tpu.memory_space<vmem>>) attributes {dimension_semantics = [], scalar_prefetch = 0 : i64, scratch_operands = 2 : i64, tpu.core_type = #tpu.core_type<tc>} {
    %c0 = arith.constant 0 : index
    %c0_0 = arith.constant 0 : index
    %0 = vector.load %arg2[%c0, %c0_0] : memref<8x32xf32, #tpu.memory_space<vmem>>, vector<8x32xf32>
    %c0_1 = arith.constant 0 : index
    %c0_2 = arith.constant 0 : index
    %1 = vector.load %arg5[%c0_1, %c0_2] : memref<1x8xf32, #tpu.memory_space<vmem>>, vector<1x8xf32>
    %c0_3 = arith.constant 0 : index
    %c0_4 = arith.constant 0 : index
    %2 = vector.load %arg0[%c0_3, %c0_4] : memref<16x8xf32, #tpu.memory_space<vmem>>, vector<16x8xf32>
    %c0_5 = arith.constant 0 : index
    %c0_6 = arith.constant 0 : index
    %3 = vector.load %arg1[%c0_5, %c0_6] : memref<8x32xf32, #tpu.memory_space<vmem>>, vector<8x32xf32>
    %cst = arith.constant dense<0.000000e+00> : vector<16x32xf32>
    %4 = tpu.matmul %2, %3, %cst {dimension_numbers = #tpu.dot_dimension_numbers<[1], [0], [0], [1], [0, 0, 1, 1], [], []>} : vector<16x8xf32>, vector<8x32xf32>, vector<16x32xf32> -> vector<16x32xf32>
    %c0_7 = arith.constant 0 : index
    %c0_8 = arith.constant 0 : index
    %5 = vector.load %arg4[%c0_7, %c0_8] : memref<1x32xf32, #tpu.memory_space<vmem>>, vector<1x32xf32>
    %6 = vector.broadcast %5 : vector<1x32xf32> to vector<16x32xf32>
    %7 = arith.addf %4, %6 : vector<16x32xf32>
    %c0_9 = arith.constant 0 : index
    %c0_10 = arith.constant 0 : index
    %8 = vector.load %arg9[%c0_9, %c0_10] : memref<16x32xf32, #tpu.memory_space<vmem>>, vector<16x32xf32>
    tpu.vector_store %arg9[%c0_9, %c0_10], %7 {strides = array<i32>} : memref<16x32xf32, #tpu.memory_space<vmem>>, vector<16x32xf32>,
    %c0_11 = arith.constant 0 : index
    %c0_12 = arith.constant 0 : index
    %9 = vector.load %arg6[%c0_11, %c0_12] : memref<1x8xf32, #tpu.memory_space<vmem>>, vector<1x8xf32>
    %c0_13 = arith.constant 0 : index
    %c0_14 = arith.constant 0 : index
    %10 = vector.load %arg7[%c0_13, %c0_14] : memref<1x8xf32, #tpu.memory_space<vmem>>, vector<1x8xf32>
    %c0_i32 = arith.constant 0 : i32
    %11 = arith.index_cast %c0_i32 : i32 to index
    %c0_15 = arith.constant 0 : index
    %12 = vector.load %arg9[%11, %c0_15] : memref<16x32xf32, #tpu.memory_space<vmem>>, vector<1x32xf32>
    %cst_16 = arith.constant dense<0.000000e+00> : vector<1x32xf32>
    %13 = tpu.matmul %9, %0, %cst_16 {dimension_numbers = #tpu.dot_dimension_numbers<[1], [0], [0], [1], [0, 0, 1, 1], [], []>} : vector<1x8xf32>, vector<8x32xf32>, vector<1x32xf32> -> vector<1x32xf32>
    %14 = arith.addf %12, %13 : vector<1x32xf32>
    %15 = vector.extract_strided_slice %14 {offsets = [0, 0], sizes = [1, 24], strides = [1, 1]} : vector<1x32xf32> to vector<1x24xf32>
    %16 = arith.negf %15 : vector<1x24xf32>
    %17 = math.exp %16 : vector<1x24xf32>
    %cst_17 = arith.constant 1.000000e+00 : f32
    %18 = vector.broadcast %cst_17 : f32 to vector<1x24xf32>
    %19 = arith.addf %18, %17 : vector<1x24xf32>
    %20 = arith.divf %18, %19 : vector<1x24xf32>
    %21 = vector.extract_strided_slice %14 {offsets = [0, 24], sizes = [1, 8], strides = [1, 1]} : vector<1x32xf32> to vector<1x8xf32>
    %22 = math.tanh %21 : vector<1x8xf32>
    %23 = vector.extract_strided_slice %20 {offsets = [0, 0], sizes = [1, 8], strides = [1, 1]} : vector<1x24xf32> to vector<1x8xf32>
    %24 = vector.extract_strided_slice %20 {offsets = [0, 8], sizes = [1, 8], strides = [1, 1]} : vector<1x24xf32> to vector<1x8xf32>
    %25 = vector.extract_strided_slice %20 {offsets = [0, 16], sizes = [1, 8], strides = [1, 1]} : vector<1x24xf32> to vector<1x8xf32>
    %26 = arith.mulf %24, %10 : vector<1x8xf32>
    %27 = arith.mulf %23, %22 : vector<1x8xf32>
    %28 = arith.addf %26, %27 : vector<1x8xf32>
    %29 = math.tanh %28 : vector<1x8xf32>
    %30 = arith.mulf %25, %29 : vector<1x8xf32>
    %31 = arith.index_cast %c0_i32 : i32 to index
    %c0_18 = arith.constant 0 : index
    %32 = vector.load %arg10[%31, %c0_18] : memref<16x8xf32, #tpu.memory_space<vmem>>, vector<1x8xf32>
    tpu.vector_store %arg10[%31, %c0_18], %30 {strides = array<i32>} : memref<16x8xf32, #tpu.memory_space<vmem>>, vector<1x8xf32>,
    %c1_i32 = arith.constant 1 : i32
    %33 = arith.index_cast %c1_i32 : i32 to index
    %c0_19 = arith.constant 0 : index
    %34 = vector.load %arg9[%33, %c0_19] : memref<16x32xf32, #tpu.memory_space<vmem>>, vector<1x32xf32>
    %cst_20 = arith.constant dense<0.000000e+00> : vector<1x32xf32>
    %35 = tpu.matmul %30, %0, %cst_20 {dimension_numbers = #tpu.dot_dimension_numbers<[1], [0], [0], [1], [0, 0, 1, 1], [], []>} : vector<1x8xf32>, vector<8x32xf32>, vector<1x32xf32> -> vector<1x32xf32>
    %36 = arith.addf %34, %35 : vector<1x32xf32>
    %37 = vector.extract_strided_slice %36 {offsets = [0, 0], sizes = [1, 24], strides = [1, 1]} : vector<1x32xf32> to vector<1x24xf32>
    %38 = arith.negf %37 : vector<1x24xf32>
    %39 = math.exp %38 : vector<1x24xf32>
    %cst_21 = arith.constant 1.000000e+00 : f32
    %40 = vector.broadcast %cst_21 : f32 to vector<1x24xf32>
    %41 = arith.addf %40, %39 : vector<1x24xf32>
    %42 = arith.divf %40, %41 : vector<1x24xf32>
    %43 = vector.extract_strided_slice %36 {offsets = [0, 24], sizes = [1, 8], strides = [1, 1]} : vector<1x32xf32> to vector<1x8xf32>
    %44 = math.tanh %43 : vector<1x8xf32>
    %45 = vector.extract_strided_slice %42 {offsets = [0, 0], sizes = [1, 8], strides = [1, 1]} : vector<1x24xf32> to vector<1x8xf32>
    %46 = vector.extract_strided_slice %42 {offsets = [0, 8], sizes = [1, 8], strides = [1, 1]} : vector<1x24xf32> to vector<1x8xf32>
    %47 = vector.extract_strided_slice %42 {offsets = [0, 16], sizes = [1, 8], strides = [1, 1]} : vector<1x24xf32> to vector<1x8xf32>
    %48 = arith.mulf %46, %28 : vector<1x8xf32>
    %49 = arith.mulf %45, %44 : vector<1x8xf32>
    %50 = arith.addf %48, %49 : vector<1x8xf32>
    %51 = math.tanh %50 : vector<1x8xf32>
    %52 = arith.mulf %47, %51 : vector<1x8xf32>
    %53 = arith.index_cast %c1_i32 : i32 to index
    %c0_22 = arith.constant 0 : index
    %54 = vector.load %arg10[%53, %c0_22] : memref<16x8xf32, #tpu.memory_space<vmem>>, vector<1x8xf32>
    tpu.vector_store %arg10[%53, %c0_22], %52 {strides = array<i32>} : memref<16x8xf32, #tpu.memory_space<vmem>>, vector<1x8xf32>,
    %c2_i32 = arith.constant 2 : i32
    %55 = arith.index_cast %c2_i32 : i32 to index
    %c0_23 = arith.constant 0 : index
    %56 = vector.load %arg9[%55, %c0_23] : memref<16x32xf32, #tpu.memory_space<vmem>>, vector<1x32xf32>
    %cst_24 = arith.constant dense<0.000000e+00> : vector<1x32xf32>
    %57 = tpu.matmul %52, %0, %cst_24 {dimension_numbers = #tpu.dot_dimension_numbers<[1], [0], [0], [1], [0, 0, 1, 1], [], []>} : vector<1x8xf32>, vector<8x32xf32>, vector<1x32xf32> -> vector<1x32xf32>
    %58 = arith.addf %56, %57 : vector<1x32xf32>
    %59 = vector.extract_strided_slice %58 {offsets = [0, 0], sizes = [1, 24], strides = [1, 1]} : vector<1x32xf32> to vector<1x24xf32>
    %60 = arith.negf %59 : vector<1x24xf32>
    %61 = math.exp %60 : vector<1x24xf32>
    %cst_25 = arith.constant 1.000000e+00 : f32
    %62 = vector.broadcast %cst_25 : f32 to vector<1x24xf32>
    %63 = arith.addf %62, %61 : vector<1x24xf32>
    %64 = arith.divf %62, %63 : vector<1x24xf32>
    %65 = vector.extract_strided_slice %58 {offsets = [0, 24], sizes = [1, 8], strides = [1, 1]} : vector<1x32xf32> to vector<1x8xf32>
    %66 = math.tanh %65 : vector<1x8xf32>
    %67 = vector.extract_strided_slice %64 {offsets = [0, 0], sizes = [1, 8], strides = [1, 1]} : vector<1x24xf32> to vector<1x8xf32>
    %68 = vector.extract_strided_slice %64 {offsets = [0, 8], sizes = [1, 8], strides = [1, 1]} : vector<1x24xf32> to vector<1x8xf32>
    %69 = vector.extract_strided_slice %64 {offsets = [0, 16], sizes = [1, 8], strides = [1, 1]} : vector<1x24xf32> to vector<1x8xf32>
    %70 = arith.mulf %68, %50 : vector<1x8xf32>
    %71 = arith.mulf %67, %66 : vector<1x8xf32>
    %72 = arith.addf %70, %71 : vector<1x8xf32>
    %73 = math.tanh %72 : vector<1x8xf32>
    %74 = arith.mulf %69, %73 : vector<1x8xf32>
    %75 = arith.index_cast %c2_i32 : i32 to index
    %c0_26 = arith.constant 0 : index
    %76 = vector.load %arg10[%75, %c0_26] : memref<16x8xf32, #tpu.memory_space<vmem>>, vector<1x8xf32>
    tpu.vector_store %arg10[%75, %c0_26], %74 {strides = array<i32>} : memref<16x8xf32, #tpu.memory_space<vmem>>, vector<1x8xf32>,
    %c3_i32 = arith.constant 3 : i32
    %77 = arith.index_cast %c3_i32 : i32 to index
    %c0_27 = arith.constant 0 : index
    %78 = vector.load %arg9[%77, %c0_27] : memref<16x32xf32, #tpu.memory_space<vmem>>, vector<1x32xf32>
    %cst_28 = arith.constant dense<0.000000e+00> : vector<1x32xf32>
    %79 = tpu.matmul %74, %0, %cst_28 {dimension_numbers = #tpu.dot_dimension_numbers<[1], [0], [0], [1], [0, 0, 1, 1], [], []>} : vector<1x8xf32>, vector<8x32xf32>, vector<1x32xf32> -> vector<1x32xf32>
    %80 = arith.addf %78, %79 : vector<1x32xf32>
    %81 = vector.extract_strided_slice %80 {offsets = [0, 0], sizes = [1, 24], strides = [1, 1]} : vector<1x32xf32> to vector<1x24xf32>
    %82 = arith.negf %81 : vector<1x24xf32>
    %83 = math.exp %82 : vector<1x24xf32>
    %cst_29 = arith.constant 1.000000e+00 : f32
    %84 = vector.broadcast %cst_29 : f32 to vector<1x24xf32>
    %85 = arith.addf %84, %83 : vector<1x24xf32>
    %86 = arith.divf %84, %85 : vector<1x24xf32>
    %87 = vector.extract_strided_slice %80 {offsets = [0, 24], sizes = [1, 8], strides = [1, 1]} : vector<1x32xf32> to vector<1x8xf32>
    %88 = math.tanh %87 : vector<1x8xf32>
    %89 = vector.extract_strided_slice %86 {offsets = [0, 0], sizes = [1, 8], strides = [1, 1]} : vector<1x24xf32> to vector<1x8xf32>
    %90 = vector.extract_strided_slice %86 {offsets = [0, 8], sizes = [1, 8], strides = [1, 1]} : vector<1x24xf32> to vector<1x8xf32>
    %91 = vector.extract_strided_slice %86 {offsets = [0, 16], sizes = [1, 8], strides = [1, 1]} : vector<1x24xf32> to vector<1x8xf32>
    %92 = arith.mulf %90, %72 : vector<1x8xf32>
    %93 = arith.mulf %89, %88 : vector<1x8xf32>
    %94 = arith.addf %92, %93 : vector<1x8xf32>
    %95 = math.tanh %94 : vector<1x8xf32>
    %96 = arith.mulf %91, %95 : vector<1x8xf32>
    %97 = arith.index_cast %c3_i32 : i32 to index
    %c0_30 = arith.constant 0 : index
    %98 = vector.load %arg10[%97, %c0_30] : memref<16x8xf32, #tpu.memory_space<vmem>>, vector<1x8xf32>
    tpu.vector_store %arg10[%97, %c0_30], %96 {strides = array<i32>} : memref<16x8xf32, #tpu.memory_space<vmem>>, vector<1x8xf32>,
    %c4_i32 = arith.constant 4 : i32
    %99 = arith.index_cast %c4_i32 : i32 to index
    %c0_31 = arith.constant 0 : index
    %100 = vector.load %arg9[%99, %c0_31] : memref<16x32xf32, #tpu.memory_space<vmem>>, vector<1x32xf32>
    %cst_32 = arith.constant dense<0.000000e+00> : vector<1x32xf32>
    %101 = tpu.matmul %96, %0, %cst_32 {dimension_numbers = #tpu.dot_dimension_numbers<[1], [0], [0], [1], [0, 0, 1, 1], [], []>} : vector<1x8xf32>, vector<8x32xf32>, vector<1x32xf32> -> vector<1x32xf32>
    %102 = arith.addf %100, %101 : vector<1x32xf32>
    %103 = vector.extract_strided_slice %102 {offsets = [0, 0], sizes = [1, 24], strides = [1, 1]} : vector<1x32xf32> to vector<1x24xf32>
    %104 = arith.negf %103 : vector<1x24xf32>
    %105 = math.exp %104 : vector<1x24xf32>
    %cst_33 = arith.constant 1.000000e+00 : f32
    %106 = vector.broadcast %cst_33 : f32 to vector<1x24xf32>
    %107 = arith.addf %106, %105 : vector<1x24xf32>
    %108 = arith.divf %106, %107 : vector<1x24xf32>
    %109 = vector.extract_strided_slice %102 {offsets = [0, 24], sizes = [1, 8], strides = [1, 1]} : vector<1x32xf32> to vector<1x8xf32>
    %110 = math.tanh %109 : vector<1x8xf32>
    %111 = vector.extract_strided_slice %108 {offsets = [0, 0], sizes = [1, 8], strides = [1, 1]} : vector<1x24xf32> to vector<1x8xf32>
    %112 = vector.extract_strided_slice %108 {offsets = [0, 8], sizes = [1, 8], strides = [1, 1]} : vector<1x24xf32> to vector<1x8xf32>
    %113 = vector.extract_strided_slice %108 {offsets = [0, 16], sizes = [1, 8], strides = [1, 1]} : vector<1x24xf32> to vector<1x8xf32>
    %114 = arith.mulf %112, %94 : vector<1x8xf32>
    %115 = arith.mulf %111, %110 : vector<1x8xf32>
    %116 = arith.addf %114, %115 : vector<1x8xf32>
    %117 = math.tanh %116 : vector<1x8xf32>
    %118 = arith.mulf %113, %117 : vector<1x8xf32>
    %119 = arith.index_cast %c4_i32 : i32 to index
    %c0_34 = arith.constant 0 : index
    %120 = vector.load %arg10[%119, %c0_34] : memref<16x8xf32, #tpu.memory_space<vmem>>, vector<1x8xf32>
    tpu.vector_store %arg10[%119, %c0_34], %118 {strides = array<i32>} : memref<16x8xf32, #tpu.memory_space<vmem>>, vector<1x8xf32>,
    %c5_i32 = arith.constant 5 : i32
    %121 = arith.index_cast %c5_i32 : i32 to index
    %c0_35 = arith.constant 0 : index
    %122 = vector.load %arg9[%121, %c0_35] : memref<16x32xf32, #tpu.memory_space<vmem>>, vector<1x32xf32>
    %cst_36 = arith.constant dense<0.000000e+00> : vector<1x32xf32>
    %123 = tpu.matmul %118, %0, %cst_36 {dimension_numbers = #tpu.dot_dimension_numbers<[1], [0], [0], [1], [0, 0, 1, 1], [], []>} : vector<1x8xf32>, vector<8x32xf32>, vector<1x32xf32> -> vector<1x32xf32>
    %124 = arith.addf %122, %123 : vector<1x32xf32>
    %125 = vector.extract_strided_slice %124 {offsets = [0, 0], sizes = [1, 24], strides = [1, 1]} : vector<1x32xf32> to vector<1x24xf32>
    %126 = arith.negf %125 : vector<1x24xf32>
    %127 = math.exp %126 : vector<1x24xf32>
    %cst_37 = arith.constant 1.000000e+00 : f32
    %128 = vector.broadcast %cst_37 : f32 to vector<1x24xf32>
    %129 = arith.addf %128, %127 : vector<1x24xf32>
    %130 = arith.divf %128, %129 : vector<1x24xf32>
    %131 = vector.extract_strided_slice %124 {offsets = [0, 24], sizes = [1, 8], strides = [1, 1]} : vector<1x32xf32> to vector<1x8xf32>
    %132 = math.tanh %131 : vector<1x8xf32>
    %133 = vector.extract_strided_slice %130 {offsets = [0, 0], sizes = [1, 8], strides = [1, 1]} : vector<1x24xf32> to vector<1x8xf32>
    %134 = vector.extract_strided_slice %130 {offsets = [0, 8], sizes = [1, 8], strides = [1, 1]} : vector<1x24xf32> to vector<1x8xf32>
    %135 = vector.extract_strided_slice %130 {offsets = [0, 16], sizes = [1, 8], strides = [1, 1]} : vector<1x24xf32> to vector<1x8xf32>
    %136 = arith.mulf %134, %116 : vector<1x8xf32>
    %137 = arith.mulf %133, %132 : vector<1x8xf32>
    %138 = arith.addf %136, %137 : vector<1x8xf32>
    %139 = math.tanh %138 : vector<1x8xf32>
    %140 = arith.mulf %135, %139 : vector<1x8xf32>
    %141 = arith.index_cast %c5_i32 : i32 to index
    %c0_38 = arith.constant 0 : index
    %142 = vector.load %arg10[%141, %c0_38] : memref<16x8xf32, #tpu.memory_space<vmem>>, vector<1x8xf32>
    tpu.vector_store %arg10[%141, %c0_38], %140 {strides = array<i32>} : memref<16x8xf32, #tpu.memory_space<vmem>>, vector<1x8xf32>,
    %c6_i32 = arith.constant 6 : i32
    %143 = arith.index_cast %c6_i32 : i32 to index
    %c0_39 = arith.constant 0 : index
    %144 = vector.load %arg9[%143, %c0_39] : memref<16x32xf32, #tpu.memory_space<vmem>>, vector<1x32xf32>
    %cst_40 = arith.constant dense<0.000000e+00> : vector<1x32xf32>
    %145 = tpu.matmul %140, %0, %cst_40 {dimension_numbers = #tpu.dot_dimension_numbers<[1], [0], [0], [1], [0, 0, 1, 1], [], []>} : vector<1x8xf32>, vector<8x32xf32>, vector<1x32xf32> -> vector<1x32xf32>
    %146 = arith.addf %144, %145 : vector<1x32xf32>
    %147 = vector.extract_strided_slice %146 {offsets = [0, 0], sizes = [1, 24], strides = [1, 1]} : vector<1x32xf32> to vector<1x24xf32>
    %148 = arith.negf %147 : vector<1x24xf32>
    %149 = math.exp %148 : vector<1x24xf32>
    %cst_41 = arith.constant 1.000000e+00 : f32
    %150 = vector.broadcast %cst_41 : f32 to vector<1x24xf32>
    %151 = arith.addf %150, %149 : vector<1x24xf32>
    %152 = arith.divf %150, %151 : vector<1x24xf32>
    %153 = vector.extract_strided_slice %146 {offsets = [0, 24], sizes = [1, 8], strides = [1, 1]} : vector<1x32xf32> to vector<1x8xf32>
    %154 = math.tanh %153 : vector<1x8xf32>
    %155 = vector.extract_strided_slice %152 {offsets = [0, 0], sizes = [1, 8], strides = [1, 1]} : vector<1x24xf32> to vector<1x8xf32>
    %156 = vector.extract_strided_slice %152 {offsets = [0, 8], sizes = [1, 8], strides = [1, 1]} : vector<1x24xf32> to vector<1x8xf32>
    %157 = vector.extract_strided_slice %152 {offsets = [0, 16], sizes = [1, 8], strides = [1, 1]} : vector<1x24xf32> to vector<1x8xf32>
    %158 = arith.mulf %156, %138 : vector<1x8xf32>
    %159 = arith.mulf %155, %154 : vector<1x8xf32>
    %160 = arith.addf %158, %159 : vector<1x8xf32>
    %161 = math.tanh %160 : vector<1x8xf32>
    %162 = arith.mulf %157, %161 : vector<1x8xf32>
    %163 = arith.index_cast %c6_i32 : i32 to index
    %c0_42 = arith.constant 0 : index
    %164 = vector.load %arg10[%163, %c0_42] : memref<16x8xf32, #tpu.memory_space<vmem>>, vector<1x8xf32>
    tpu.vector_store %arg10[%163, %c0_42], %162 {strides = array<i32>} : memref<16x8xf32, #tpu.memory_space<vmem>>, vector<1x8xf32>,
    %c7_i32 = arith.constant 7 : i32
    %165 = arith.index_cast %c7_i32 : i32 to index
    %c0_43 = arith.constant 0 : index
    %166 = vector.load %arg9[%165, %c0_43] : memref<16x32xf32, #tpu.memory_space<vmem>>, vector<1x32xf32>
    %cst_44 = arith.constant dense<0.000000e+00> : vector<1x32xf32>
    %167 = tpu.matmul %162, %0, %cst_44 {dimension_numbers = #tpu.dot_dimension_numbers<[1], [0], [0], [1], [0, 0, 1, 1], [], []>} : vector<1x8xf32>, vector<8x32xf32>, vector<1x32xf32> -> vector<1x32xf32>
    %168 = arith.addf %166, %167 : vector<1x32xf32>
    %169 = vector.extract_strided_slice %168 {offsets = [0, 0], sizes = [1, 24], strides = [1, 1]} : vector<1x32xf32> to vector<1x24xf32>
    %170 = arith.negf %169 : vector<1x24xf32>
    %171 = math.exp %170 : vector<1x24xf32>
    %cst_45 = arith.constant 1.000000e+00 : f32
    %172 = vector.broadcast %cst_45 : f32 to vector<1x24xf32>
    %173 = arith.addf %172, %171 : vector<1x24xf32>
    %174 = arith.divf %172, %173 : vector<1x24xf32>
    %175 = vector.extract_strided_slice %168 {offsets = [0, 24], sizes = [1, 8], strides = [1, 1]} : vector<1x32xf32> to vector<1x8xf32>
    %176 = math.tanh %175 : vector<1x8xf32>
    %177 = vector.extract_strided_slice %174 {offsets = [0, 0], sizes = [1, 8], strides = [1, 1]} : vector<1x24xf32> to vector<1x8xf32>
    %178 = vector.extract_strided_slice %174 {offsets = [0, 8], sizes = [1, 8], strides = [1, 1]} : vector<1x24xf32> to vector<1x8xf32>
    %179 = vector.extract_strided_slice %174 {offsets = [0, 16], sizes = [1, 8], strides = [1, 1]} : vector<1x24xf32> to vector<1x8xf32>
    %180 = arith.mulf %178, %160 : vector<1x8xf32>
    %181 = arith.mulf %177, %176 : vector<1x8xf32>
    %182 = arith.addf %180, %181 : vector<1x8xf32>
    %183 = math.tanh %182 : vector<1x8xf32>
    %184 = arith.mulf %179, %183 : vector<1x8xf32>
    %185 = arith.index_cast %c7_i32 : i32 to index
    %c0_46 = arith.constant 0 : index
    %186 = vector.load %arg10[%185, %c0_46] : memref<16x8xf32, #tpu.memory_space<vmem>>, vector<1x8xf32>
    tpu.vector_store %arg10[%185, %c0_46], %184 {strides = array<i32>} : memref<16x8xf32, #tpu.memory_space<vmem>>, vector<1x8xf32>,
    %c8_i32 = arith.constant 8 : i32
    %187 = arith.index_cast %c8_i32 : i32 to index
    %c0_47 = arith.constant 0 : index
    %188 = vector.load %arg9[%187, %c0_47] : memref<16x32xf32, #tpu.memory_space<vmem>>, vector<1x32xf32>
    %cst_48 = arith.constant dense<0.000000e+00> : vector<1x32xf32>
    %189 = tpu.matmul %184, %0, %cst_48 {dimension_numbers = #tpu.dot_dimension_numbers<[1], [0], [0], [1], [0, 0, 1, 1], [], []>} : vector<1x8xf32>, vector<8x32xf32>, vector<1x32xf32> -> vector<1x32xf32>
    %190 = arith.addf %188, %189 : vector<1x32xf32>
    %191 = vector.extract_strided_slice %190 {offsets = [0, 0], sizes = [1, 24], strides = [1, 1]} : vector<1x32xf32> to vector<1x24xf32>
    %192 = arith.negf %191 : vector<1x24xf32>
    %193 = math.exp %192 : vector<1x24xf32>
    %cst_49 = arith.constant 1.000000e+00 : f32
    %194 = vector.broadcast %cst_49 : f32 to vector<1x24xf32>
    %195 = arith.addf %194, %193 : vector<1x24xf32>
    %196 = arith.divf %194, %195 : vector<1x24xf32>
    %197 = vector.extract_strided_slice %190 {offsets = [0, 24], sizes = [1, 8], strides = [1, 1]} : vector<1x32xf32> to vector<1x8xf32>
    %198 = math.tanh %197 : vector<1x8xf32>
    %199 = vector.extract_strided_slice %196 {offsets = [0, 0], sizes = [1, 8], strides = [1, 1]} : vector<1x24xf32> to vector<1x8xf32>
    %200 = vector.extract_strided_slice %196 {offsets = [0, 8], sizes = [1, 8], strides = [1, 1]} : vector<1x24xf32> to vector<1x8xf32>
    %201 = vector.extract_strided_slice %196 {offsets = [0, 16], sizes = [1, 8], strides = [1, 1]} : vector<1x24xf32> to vector<1x8xf32>
    %202 = arith.mulf %200, %182 : vector<1x8xf32>
    %203 = arith.mulf %199, %198 : vector<1x8xf32>
    %204 = arith.addf %202, %203 : vector<1x8xf32>
    %205 = math.tanh %204 : vector<1x8xf32>
    %206 = arith.mulf %201, %205 : vector<1x8xf32>
    %207 = arith.index_cast %c8_i32 : i32 to index
    %c0_50 = arith.constant 0 : index
    %208 = vector.load %arg10[%207, %c0_50] : memref<16x8xf32, #tpu.memory_space<vmem>>, vector<1x8xf32>
    tpu.vector_store %arg10[%207, %c0_50], %206 {strides = array<i32>} : memref<16x8xf32, #tpu.memory_space<vmem>>, vector<1x8xf32>,
    %c9_i32 = arith.constant 9 : i32
    %209 = arith.index_cast %c9_i32 : i32 to index
    %c0_51 = arith.constant 0 : index
    %210 = vector.load %arg9[%209, %c0_51] : memref<16x32xf32, #tpu.memory_space<vmem>>, vector<1x32xf32>
    %cst_52 = arith.constant dense<0.000000e+00> : vector<1x32xf32>
    %211 = tpu.matmul %206, %0, %cst_52 {dimension_numbers = #tpu.dot_dimension_numbers<[1], [0], [0], [1], [0, 0, 1, 1], [], []>} : vector<1x8xf32>, vector<8x32xf32>, vector<1x32xf32> -> vector<1x32xf32>
    %212 = arith.addf %210, %211 : vector<1x32xf32>
    %213 = vector.extract_strided_slice %212 {offsets = [0, 0], sizes = [1, 24], strides = [1, 1]} : vector<1x32xf32> to vector<1x24xf32>
    %214 = arith.negf %213 : vector<1x24xf32>
    %215 = math.exp %214 : vector<1x24xf32>
    %cst_53 = arith.constant 1.000000e+00 : f32
    %216 = vector.broadcast %cst_53 : f32 to vector<1x24xf32>
    %217 = arith.addf %216, %215 : vector<1x24xf32>
    %218 = arith.divf %216, %217 : vector<1x24xf32>
    %219 = vector.extract_strided_slice %212 {offsets = [0, 24], sizes = [1, 8], strides = [1, 1]} : vector<1x32xf32> to vector<1x8xf32>
    %220 = math.tanh %219 : vector<1x8xf32>
    %221 = vector.extract_strided_slice %218 {offsets = [0, 0], sizes = [1, 8], strides = [1, 1]} : vector<1x24xf32> to vector<1x8xf32>
    %222 = vector.extract_strided_slice %218 {offsets = [0, 8], sizes = [1, 8], strides = [1, 1]} : vector<1x24xf32> to vector<1x8xf32>
    %223 = vector.extract_strided_slice %218 {offsets = [0, 16], sizes = [1, 8], strides = [1, 1]} : vector<1x24xf32> to vector<1x8xf32>
    %224 = arith.mulf %222, %204 : vector<1x8xf32>
    %225 = arith.mulf %221, %220 : vector<1x8xf32>
    %226 = arith.addf %224, %225 : vector<1x8xf32>
    %227 = math.tanh %226 : vector<1x8xf32>
    %228 = arith.mulf %223, %227 : vector<1x8xf32>
    %229 = arith.index_cast %c9_i32 : i32 to index
    %c0_54 = arith.constant 0 : index
    %230 = vector.load %arg10[%229, %c0_54] : memref<16x8xf32, #tpu.memory_space<vmem>>, vector<1x8xf32>
    tpu.vector_store %arg10[%229, %c0_54], %228 {strides = array<i32>} : memref<16x8xf32, #tpu.memory_space<vmem>>, vector<1x8xf32>,
    %c10_i32 = arith.constant 10 : i32
    %231 = arith.index_cast %c10_i32 : i32 to index
    %c0_55 = arith.constant 0 : index
    %232 = vector.load %arg9[%231, %c0_55] : memref<16x32xf32, #tpu.memory_space<vmem>>, vector<1x32xf32>
    %cst_56 = arith.constant dense<0.000000e+00> : vector<1x32xf32>
    %233 = tpu.matmul %228, %0, %cst_56 {dimension_numbers = #tpu.dot_dimension_numbers<[1], [0], [0], [1], [0, 0, 1, 1], [], []>} : vector<1x8xf32>, vector<8x32xf32>, vector<1x32xf32> -> vector<1x32xf32>
    %234 = arith.addf %232, %233 : vector<1x32xf32>
    %235 = vector.extract_strided_slice %234 {offsets = [0, 0], sizes = [1, 24], strides = [1, 1]} : vector<1x32xf32> to vector<1x24xf32>
    %236 = arith.negf %235 : vector<1x24xf32>
    %237 = math.exp %236 : vector<1x24xf32>
    %cst_57 = arith.constant 1.000000e+00 : f32
    %238 = vector.broadcast %cst_57 : f32 to vector<1x24xf32>
    %239 = arith.addf %238, %237 : vector<1x24xf32>
    %240 = arith.divf %238, %239 : vector<1x24xf32>
    %241 = vector.extract_strided_slice %234 {offsets = [0, 24], sizes = [1, 8], strides = [1, 1]} : vector<1x32xf32> to vector<1x8xf32>
    %242 = math.tanh %241 : vector<1x8xf32>
    %243 = vector.extract_strided_slice %240 {offsets = [0, 0], sizes = [1, 8], strides = [1, 1]} : vector<1x24xf32> to vector<1x8xf32>
    %244 = vector.extract_strided_slice %240 {offsets = [0, 8], sizes = [1, 8], strides = [1, 1]} : vector<1x24xf32> to vector<1x8xf32>
    %245 = vector.extract_strided_slice %240 {offsets = [0, 16], sizes = [1, 8], strides = [1, 1]} : vector<1x24xf32> to vector<1x8xf32>
    %246 = arith.mulf %244, %226 : vector<1x8xf32>
    %247 = arith.mulf %243, %242 : vector<1x8xf32>
    %248 = arith.addf %246, %247 : vector<1x8xf32>
    %249 = math.tanh %248 : vector<1x8xf32>
    %250 = arith.mulf %245, %249 : vector<1x8xf32>
    %251 = arith.index_cast %c10_i32 : i32 to index
    %c0_58 = arith.constant 0 : index
    %252 = vector.load %arg10[%251, %c0_58] : memref<16x8xf32, #tpu.memory_space<vmem>>, vector<1x8xf32>
    tpu.vector_store %arg10[%251, %c0_58], %250 {strides = array<i32>} : memref<16x8xf32, #tpu.memory_space<vmem>>, vector<1x8xf32>,
    %c11_i32 = arith.constant 11 : i32
    %253 = arith.index_cast %c11_i32 : i32 to index
    %c0_59 = arith.constant 0 : index
    %254 = vector.load %arg9[%253, %c0_59] : memref<16x32xf32, #tpu.memory_space<vmem>>, vector<1x32xf32>
    %cst_60 = arith.constant dense<0.000000e+00> : vector<1x32xf32>
    %255 = tpu.matmul %250, %0, %cst_60 {dimension_numbers = #tpu.dot_dimension_numbers<[1], [0], [0], [1], [0, 0, 1, 1], [], []>} : vector<1x8xf32>, vector<8x32xf32>, vector<1x32xf32> -> vector<1x32xf32>
    %256 = arith.addf %254, %255 : vector<1x32xf32>
    %257 = vector.extract_strided_slice %256 {offsets = [0, 0], sizes = [1, 24], strides = [1, 1]} : vector<1x32xf32> to vector<1x24xf32>
    %258 = arith.negf %257 : vector<1x24xf32>
    %259 = math.exp %258 : vector<1x24xf32>
    %cst_61 = arith.constant 1.000000e+00 : f32
    %260 = vector.broadcast %cst_61 : f32 to vector<1x24xf32>
    %261 = arith.addf %260, %259 : vector<1x24xf32>
    %262 = arith.divf %260, %261 : vector<1x24xf32>
    %263 = vector.extract_strided_slice %256 {offsets = [0, 24], sizes = [1, 8], strides = [1, 1]} : vector<1x32xf32> to vector<1x8xf32>
    %264 = math.tanh %263 : vector<1x8xf32>
    %265 = vector.extract_strided_slice %262 {offsets = [0, 0], sizes = [1, 8], strides = [1, 1]} : vector<1x24xf32> to vector<1x8xf32>
    %266 = vector.extract_strided_slice %262 {offsets = [0, 8], sizes = [1, 8], strides = [1, 1]} : vector<1x24xf32> to vector<1x8xf32>
    %267 = vector.extract_strided_slice %262 {offsets = [0, 16], sizes = [1, 8], strides = [1, 1]} : vector<1x24xf32> to vector<1x8xf32>
    %268 = arith.mulf %266, %248 : vector<1x8xf32>
    %269 = arith.mulf %265, %264 : vector<1x8xf32>
    %270 = arith.addf %268, %269 : vector<1x8xf32>
    %271 = math.tanh %270 : vector<1x8xf32>
    %272 = arith.mulf %267, %271 : vector<1x8xf32>
    %273 = arith.index_cast %c11_i32 : i32 to index
    %c0_62 = arith.constant 0 : index
    %274 = vector.load %arg10[%273, %c0_62] : memref<16x8xf32, #tpu.memory_space<vmem>>, vector<1x8xf32>
    tpu.vector_store %arg10[%273, %c0_62], %272 {strides = array<i32>} : memref<16x8xf32, #tpu.memory_space<vmem>>, vector<1x8xf32>,
    %c12_i32 = arith.constant 12 : i32
    %275 = arith.index_cast %c12_i32 : i32 to index
    %c0_63 = arith.constant 0 : index
    %276 = vector.load %arg9[%275, %c0_63] : memref<16x32xf32, #tpu.memory_space<vmem>>, vector<1x32xf32>
    %cst_64 = arith.constant dense<0.000000e+00> : vector<1x32xf32>
    %277 = tpu.matmul %272, %0, %cst_64 {dimension_numbers = #tpu.dot_dimension_numbers<[1], [0], [0], [1], [0, 0, 1, 1], [], []>} : vector<1x8xf32>, vector<8x32xf32>, vector<1x32xf32> -> vector<1x32xf32>
    %278 = arith.addf %276, %277 : vector<1x32xf32>
    %279 = vector.extract_strided_slice %278 {offsets = [0, 0], sizes = [1, 24], strides = [1, 1]} : vector<1x32xf32> to vector<1x24xf32>
    %280 = arith.negf %279 : vector<1x24xf32>
    %281 = math.exp %280 : vector<1x24xf32>
    %cst_65 = arith.constant 1.000000e+00 : f32
    %282 = vector.broadcast %cst_65 : f32 to vector<1x24xf32>
    %283 = arith.addf %282, %281 : vector<1x24xf32>
    %284 = arith.divf %282, %283 : vector<1x24xf32>
    %285 = vector.extract_strided_slice %278 {offsets = [0, 24], sizes = [1, 8], strides = [1, 1]} : vector<1x32xf32> to vector<1x8xf32>
    %286 = math.tanh %285 : vector<1x8xf32>
    %287 = vector.extract_strided_slice %284 {offsets = [0, 0], sizes = [1, 8], strides = [1, 1]} : vector<1x24xf32> to vector<1x8xf32>
    %288 = vector.extract_strided_slice %284 {offsets = [0, 8], sizes = [1, 8], strides = [1, 1]} : vector<1x24xf32> to vector<1x8xf32>
    %289 = vector.extract_strided_slice %284 {offsets = [0, 16], sizes = [1, 8], strides = [1, 1]} : vector<1x24xf32> to vector<1x8xf32>
    %290 = arith.mulf %288, %270 : vector<1x8xf32>
    %291 = arith.mulf %287, %286 : vector<1x8xf32>
    %292 = arith.addf %290, %291 : vector<1x8xf32>
    %293 = math.tanh %292 : vector<1x8xf32>
    %294 = arith.mulf %289, %293 : vector<1x8xf32>
    %295 = arith.index_cast %c12_i32 : i32 to index
    %c0_66 = arith.constant 0 : index
    %296 = vector.load %arg10[%295, %c0_66] : memref<16x8xf32, #tpu.memory_space<vmem>>, vector<1x8xf32>
    tpu.vector_store %arg10[%295, %c0_66], %294 {strides = array<i32>} : memref<16x8xf32, #tpu.memory_space<vmem>>, vector<1x8xf32>,
    %c13_i32 = arith.constant 13 : i32
    %297 = arith.index_cast %c13_i32 : i32 to index
    %c0_67 = arith.constant 0 : index
    %298 = vector.load %arg9[%297, %c0_67] : memref<16x32xf32, #tpu.memory_space<vmem>>, vector<1x32xf32>
    %cst_68 = arith.constant dense<0.000000e+00> : vector<1x32xf32>
    %299 = tpu.matmul %294, %0, %cst_68 {dimension_numbers = #tpu.dot_dimension_numbers<[1], [0], [0], [1], [0, 0, 1, 1], [], []>} : vector<1x8xf32>, vector<8x32xf32>, vector<1x32xf32> -> vector<1x32xf32>
    %300 = arith.addf %298, %299 : vector<1x32xf32>
    %301 = vector.extract_strided_slice %300 {offsets = [0, 0], sizes = [1, 24], strides = [1, 1]} : vector<1x32xf32> to vector<1x24xf32>
    %302 = arith.negf %301 : vector<1x24xf32>
    %303 = math.exp %302 : vector<1x24xf32>
    %cst_69 = arith.constant 1.000000e+00 : f32
    %304 = vector.broadcast %cst_69 : f32 to vector<1x24xf32>
    %305 = arith.addf %304, %303 : vector<1x24xf32>
    %306 = arith.divf %304, %305 : vector<1x24xf32>
    %307 = vector.extract_strided_slice %300 {offsets = [0, 24], sizes = [1, 8], strides = [1, 1]} : vector<1x32xf32> to vector<1x8xf32>
    %308 = math.tanh %307 : vector<1x8xf32>
    %309 = vector.extract_strided_slice %306 {offsets = [0, 0], sizes = [1, 8], strides = [1, 1]} : vector<1x24xf32> to vector<1x8xf32>
    %310 = vector.extract_strided_slice %306 {offsets = [0, 8], sizes = [1, 8], strides = [1, 1]} : vector<1x24xf32> to vector<1x8xf32>
    %311 = vector.extract_strided_slice %306 {offsets = [0, 16], sizes = [1, 8], strides = [1, 1]} : vector<1x24xf32> to vector<1x8xf32>
    %312 = arith.mulf %310, %292 : vector<1x8xf32>
    %313 = arith.mulf %309, %308 : vector<1x8xf32>
    %314 = arith.addf %312, %313 : vector<1x8xf32>
    %315 = math.tanh %314 : vector<1x8xf32>
    %316 = arith.mulf %311, %315 : vector<1x8xf32>
    %317 = arith.index_cast %c13_i32 : i32 to index
    %c0_70 = arith.constant 0 : index
    %318 = vector.load %arg10[%317, %c0_70] : memref<16x8xf32, #tpu.memory_space<vmem>>, vector<1x8xf32>
    tpu.vector_store %arg10[%317, %c0_70], %316 {strides = array<i32>} : memref<16x8xf32, #tpu.memory_space<vmem>>, vector<1x8xf32>,
    %c14_i32 = arith.constant 14 : i32
    %319 = arith.index_cast %c14_i32 : i32 to index
    %c0_71 = arith.constant 0 : index
    %320 = vector.load %arg9[%319, %c0_71] : memref<16x32xf32, #tpu.memory_space<vmem>>, vector<1x32xf32>
    %cst_72 = arith.constant dense<0.000000e+00> : vector<1x32xf32>
    %321 = tpu.matmul %316, %0, %cst_72 {dimension_numbers = #tpu.dot_dimension_numbers<[1], [0], [0], [1], [0, 0, 1, 1], [], []>} : vector<1x8xf32>, vector<8x32xf32>, vector<1x32xf32> -> vector<1x32xf32>
    %322 = arith.addf %320, %321 : vector<1x32xf32>
    %323 = vector.extract_strided_slice %322 {offsets = [0, 0], sizes = [1, 24], strides = [1, 1]} : vector<1x32xf32> to vector<1x24xf32>
    %324 = arith.negf %323 : vector<1x24xf32>
    %325 = math.exp %324 : vector<1x24xf32>
    %cst_73 = arith.constant 1.000000e+00 : f32
    %326 = vector.broadcast %cst_73 : f32 to vector<1x24xf32>
    %327 = arith.addf %326, %325 : vector<1x24xf32>
    %328 = arith.divf %326, %327 : vector<1x24xf32>
    %329 = vector.extract_strided_slice %322 {offsets = [0, 24], sizes = [1, 8], strides = [1, 1]} : vector<1x32xf32> to vector<1x8xf32>
    %330 = math.tanh %329 : vector<1x8xf32>
    %331 = vector.extract_strided_slice %328 {offsets = [0, 0], sizes = [1, 8], strides = [1, 1]} : vector<1x24xf32> to vector<1x8xf32>
    %332 = vector.extract_strided_slice %328 {offsets = [0, 8], sizes = [1, 8], strides = [1, 1]} : vector<1x24xf32> to vector<1x8xf32>
    %333 = vector.extract_strided_slice %328 {offsets = [0, 16], sizes = [1, 8], strides = [1, 1]} : vector<1x24xf32> to vector<1x8xf32>
    %334 = arith.mulf %332, %314 : vector<1x8xf32>
    %335 = arith.mulf %331, %330 : vector<1x8xf32>
    %336 = arith.addf %334, %335 : vector<1x8xf32>
    %337 = math.tanh %336 : vector<1x8xf32>
    %338 = arith.mulf %333, %337 : vector<1x8xf32>
    %339 = arith.index_cast %c14_i32 : i32 to index
    %c0_74 = arith.constant 0 : index
    %340 = vector.load %arg10[%339, %c0_74] : memref<16x8xf32, #tpu.memory_space<vmem>>, vector<1x8xf32>
    tpu.vector_store %arg10[%339, %c0_74], %338 {strides = array<i32>} : memref<16x8xf32, #tpu.memory_space<vmem>>, vector<1x8xf32>,
    %c15_i32 = arith.constant 15 : i32
    %341 = arith.index_cast %c15_i32 : i32 to index
    %c0_75 = arith.constant 0 : index
    %342 = vector.load %arg9[%341, %c0_75] : memref<16x32xf32, #tpu.memory_space<vmem>>, vector<1x32xf32>
    %cst_76 = arith.constant dense<0.000000e+00> : vector<1x32xf32>
    %343 = tpu.matmul %338, %0, %cst_76 {dimension_numbers = #tpu.dot_dimension_numbers<[1], [0], [0], [1], [0, 0, 1, 1], [], []>} : vector<1x8xf32>, vector<8x32xf32>, vector<1x32xf32> -> vector<1x32xf32>
    %344 = arith.addf %342, %343 : vector<1x32xf32>
    %345 = vector.extract_strided_slice %344 {offsets = [0, 0], sizes = [1, 24], strides = [1, 1]} : vector<1x32xf32> to vector<1x24xf32>
    %346 = arith.negf %345 : vector<1x24xf32>
    %347 = math.exp %346 : vector<1x24xf32>
    %cst_77 = arith.constant 1.000000e+00 : f32
    %348 = vector.broadcast %cst_77 : f32 to vector<1x24xf32>
    %349 = arith.addf %348, %347 : vector<1x24xf32>
    %350 = arith.divf %348, %349 : vector<1x24xf32>
    %351 = vector.extract_strided_slice %344 {offsets = [0, 24], sizes = [1, 8], strides = [1, 1]} : vector<1x32xf32> to vector<1x8xf32>
    %352 = math.tanh %351 : vector<1x8xf32>
    %353 = vector.extract_strided_slice %350 {offsets = [0, 0], sizes = [1, 8], strides = [1, 1]} : vector<1x24xf32> to vector<1x8xf32>
    %354 = vector.extract_strided_slice %350 {offsets = [0, 8], sizes = [1, 8], strides = [1, 1]} : vector<1x24xf32> to vector<1x8xf32>
    %355 = vector.extract_strided_slice %350 {offsets = [0, 16], sizes = [1, 8], strides = [1, 1]} : vector<1x24xf32> to vector<1x8xf32>
    %356 = arith.mulf %354, %336 : vector<1x8xf32>
    %357 = arith.mulf %353, %352 : vector<1x8xf32>
    %358 = arith.addf %356, %357 : vector<1x8xf32>
    %359 = math.tanh %358 : vector<1x8xf32>
    %360 = arith.mulf %355, %359 : vector<1x8xf32>
    %361 = arith.index_cast %c15_i32 : i32 to index
    %c0_78 = arith.constant 0 : index
    %362 = vector.load %arg10[%361, %c0_78] : memref<16x8xf32, #tpu.memory_space<vmem>>, vector<1x8xf32>
    tpu.vector_store %arg10[%361, %c0_78], %360 {strides = array<i32>} : memref<16x8xf32, #tpu.memory_space<vmem>>, vector<1x8xf32>,
    %c16_i32 = arith.constant 16 : i32
    %c0_79 = arith.constant 0 : index
    %c0_80 = arith.constant 0 : index
    %363 = vector.load %arg10[%c0_79, %c0_80] : memref<16x8xf32, #tpu.memory_space<vmem>>, vector<16x8xf32>
    %c0_81 = arith.constant 0 : index
    %c0_82 = arith.constant 0 : index
    %364 = vector.load %arg3[%c0_81, %c0_82] : memref<8x8xf32, #tpu.memory_space<vmem>>, vector<8x8xf32>
    %cst_83 = arith.constant dense<0.000000e+00> : vector<16x8xf32>
    %365 = tpu.matmul %363, %364, %cst_83 {dimension_numbers = #tpu.dot_dimension_numbers<[1], [0], [0], [1], [0, 0, 1, 1], [], []>} : vector<16x8xf32>, vector<8x8xf32>, vector<16x8xf32> -> vector<16x8xf32>
    %366 = vector.broadcast %1 : vector<1x8xf32> to vector<16x8xf32>
    %367 = arith.addf %365, %366 : vector<16x8xf32>
    %368 = arith.negf %367 : vector<16x8xf32>
    %369 = math.exp %368 : vector<16x8xf32>
    %cst_84 = arith.constant 1.000000e+00 : f32
    %370 = vector.broadcast %cst_84 : f32 to vector<16x8xf32>
    %371 = arith.addf %370, %369 : vector<16x8xf32>
    %372 = arith.divf %370, %371 : vector<16x8xf32>
    %cst_85 = arith.constant 2.000000e+00 : f32
    %373 = vector.broadcast %cst_85 : f32 to vector<16x8xf32>
    %374 = arith.mulf %373, %372 : vector<16x8xf32>
    %c0_86 = arith.constant 0 : index
    %c0_87 = arith.constant 0 : index
    %375 = vector.load %arg8[%c0_86, %c0_87] : memref<16x8xf32, #tpu.memory_space<vmem>>, vector<16x8xf32>
    tpu.vector_store %arg8[%c0_86, %c0_87], %374 {strides = array<i32>} : memref<16x8xf32, #tpu.memory_space<vmem>>, vector<16x8xf32>,
    return
  }
}

</mosaic_0001>

<llo_original>
// kernel: tpu_custom_call.1
$region0: #{tpu_custom_call.1}
  #allocation0 [shape = 'u32[]', space=smem, size = 0x4, offset = 0x4, fixed_abs, tag = 'smem constant byte address 0x4 - core index']
  #allocation1 [shape = 'u32[144,128]{1,0:T(1,128)}', space=vmem, size = 0x12000, scoped, tag = 'internal scratch']
  #allocation2 [shape = 'f32[16,32]{1,0:T(8,128)}', space=vmem, size = 0x2000, scoped, tag = 'scratch operand']
  #allocation3 [shape = 'f32[16,8]{1,0:T(8,128)}', space=vmem, size = 0x2000, scoped, tag = 'scratch operand']
  %s0 = inlined_call_operand.vmem [shape: f32[16,8], index: 0, kind: input, shape index: {}]
  %s1 = inlined_call_operand.vmem [shape: f32[8,32], index: 1, kind: input, shape index: {}]
  %s2 = inlined_call_operand.vmem [shape: f32[8,32], index: 2, kind: input, shape index: {}]
  %s3 = inlined_call_operand.vmem [shape: f32[8,8], index: 3, kind: input, shape index: {}]
  %s4 = inlined_call_operand.vmem [shape: f32[1,32], index: 4, kind: input, shape index: {}]
  %s5 = inlined_call_operand.vmem [shape: f32[1,8], index: 5, kind: input, shape index: {}]
  %s6 = inlined_call_operand.vmem [shape: f32[1,8], index: 6, kind: input, shape index: {}]
  %s7 = inlined_call_operand.vmem [shape: f32[1,8], index: 7, kind: input, shape index: {}]
  %s8 = inlined_call_operand.vmem [shape: f32[16,8], index: 8, kind: output, shape index: {}]
  %s9 = sld [smem:[#allocation0]]
  $region42: #{tpu_custom_call.1} parent=0
    _
  %s11 = ssub.s32 1, %s9
  %s12 = scalar_select 0, %s11, %s9
  // Predicated region
  $region2: #{tpu_custom_call.1} parent=0 // pred_check
    _
  $region3: #{tpu_custom_call.1} parent=0 // pred_check_branch
    %14 = sbr.rel (0) target = $region5
  $region4: #{tpu_custom_call.1} parent=0 // pred_region
    _
  $region5: #{tpu_custom_call.1} parent=0 // pred_fallthru
    _
  // Predicated region
  $region6: #{tpu_custom_call.1} parent=0 // pred_check
    _
  $region7: #{tpu_custom_call.1} parent=0 // pred_check_branch
    %16 = sbr.rel (0) target = $region9
  $region8: #{tpu_custom_call.1} parent=0 // pred_region
    _
  $region9: #{tpu_custom_call.1} parent=0 // pred_fallthru
    _
  // Predicated region
  $region10: #{tpu_custom_call.1} parent=0 // pred_check
    _
  $region11: #{tpu_custom_call.1} parent=0 // pred_check_branch
    %18 = sbr.rel (0) target = $region13
  $region12: #{tpu_custom_call.1} parent=0 // pred_region
    _
  $region13: #{tpu_custom_call.1} parent=0 // pred_fallthru
    _
  // Predicated region
  $region14: #{tpu_custom_call.1} parent=0 // pred_check
    _
  $region15: #{tpu_custom_call.1} parent=0 // pred_check_branch
    %20 = sbr.rel (0) target = $region17
  $region16: #{tpu_custom_call.1} parent=0 // pred_region
    _
  $region17: #{tpu_custom_call.1} parent=0 // pred_fallthru
    _
  // Predicated region
  $region18: #{tpu_custom_call.1} parent=0 // pred_check
    _
  $region19: #{tpu_custom_call.1} parent=0 // pred_check_branch
    %22 = sbr.rel (0) target = $region21
  $region20: #{tpu_custom_call.1} parent=0 // pred_region
    _
  $region21: #{tpu_custom_call.1} parent=0 // pred_fallthru
    _
  // Predicated region
  $region22: #{tpu_custom_call.1} parent=0 // pred_check
    _
  $region23: #{tpu_custom_call.1} parent=0 // pred_check_branch
    %24 = sbr.rel (0) target = $region25
  $region24: #{tpu_custom_call.1} parent=0 // pred_region
    _
  $region25: #{tpu_custom_call.1} parent=0 // pred_fallthru
    _
  // Predicated region
  $region26: #{tpu_custom_call.1} parent=0 // pred_check
    _
  $region27: #{tpu_custom_call.1} parent=0 // pred_check_branch
    %26 = sbr.rel (0) target = $region29
  $region28: #{tpu_custom_call.1} parent=0 // pred_region
    _
  $region29: #{tpu_custom_call.1} parent=0 // pred_fallthru
    _
  // Predicated region
  $region30: #{tpu_custom_call.1} parent=0 // pred_check
    _
  $region31: #{tpu_custom_call.1} parent=0 // pred_check_branch
    %28 = sbr.rel (0) target = $region33
  $region32: #{tpu_custom_call.1} parent=0 // pred_region
    _
  $region33: #{tpu_custom_call.1} parent=0 // pred_fallthru
    _
  %v29 = vld [vmem:[%s2] sm:$0xff]
  %v30 = vld [vmem:[%s5] sm:$0x1]
  %v31 = vld [vmem:[%s0] sm:$0xff]
  %v32 = vld [vmem:[%s0 + $0x8] sm:$0xff]
  %v33 = vld [vmem:[%s1] sm:$0xff]
  %v34 = vld [vmem:[%s4] sm:$0x1]
  %v36 = vlaneseq
  %v37 = vshrl.u32 %v36, 7
  %v38 = vsub.s32 0, %v37
  %v39 = vrot.slane %v34, %v38
  %vm41 = vcmask 64512
  %v43 = vsel %vm41, %v31, 0
  %v46 = vsel %vm41, %v32, 0
  %48 = vmatprep.subr.mxu0 0.0
  %49 = vmatpush1.msra.mxu0 %v33
  %50 = vmatprep.subr.mxu0 0.0
  %51 = vmatpush1.msra.mxu0 0.0
  %52 = vmatprep.subr.mxu0 0.0
  %53 = vmatpush1.msra.mxu0 0.0
  %54 = vmatprep.subr.mxu0 0.0
  %55 = vmatpush1.msra.mxu0 0.0
  %56 = vmatprep.subr.mxu0 0.0
  %57 = vmatpush1.msra.mxu0 0.0
  %58 = vmatprep.subr.mxu0 0.0
  %59 = vmatpush1.msra.mxu0 0.0
  %60 = vmatprep.subr.mxu0 0.0
  %61 = vmatpush1.msra.mxu0 0.0
  %62 = vmatprep.subr.mxu0 0.0
  %63 = vmatpush1.msra.mxu0 0.0
  %64 = vmatprep.subr.mxu0 0.0
  %65 = vmatpush1.msra.mxu0 0.0
  %66 = vmatprep.subr.mxu0 0.0
  %67 = vmatpush1.msra.mxu0 0.0
  %68 = vmatprep.subr.mxu0 0.0
  %69 = vmatpush1.msra.mxu0 0.0
  %70 = vmatprep.subr.mxu0 0.0
  %71 = vmatpush1.msra.mxu0 0.0
  %72 = vmatprep.subr.mxu0 0.0
  %73 = vmatpush1.msra.mxu0 0.0
  %74 = vmatprep.subr.mxu0 0.0
  %75 = vmatpush1.msra.mxu0 0.0
  %76 = vmatprep.subr.mxu0 0.0
  %77 = vmatpush1.msra.mxu0 0.0
  %78 = vmatprep.subr.mxu0 0.0
  %79 = vmatpush1.msra.mxu0 0.0
  %80 = vmatprep.subr.mxu0 0.0
  %81 = vmatpush1.msra.mxu0 0.0
  %82 = vmatprep.subr.mxu0 0.0
  %83 = vmatpush1.msra.mxu0 0.0
  %84 = vmatprep.subr.mxu0 0.0
  %85 = vmatpush1.msra.mxu0 0.0
  %86 = vmatprep.subr.mxu0 0.0
  %87 = vmatpush1.msra.mxu0 0.0
  %88 = vmatprep.subr.mxu0 0.0
  %89 = vmatpush1.msra.mxu0 0.0
  %90 = vmatprep.subr.mxu0 0.0
  %91 = vmatpush1.msra.mxu0 0.0
  %92 = vmatprep.subr.mxu0 0.0
  %93 = vmatpush1.msra.mxu0 0.0
  %94 = vmatprep.subr.mxu0 0.0
  %95 = vmatpush1.msra.mxu0 0.0
  %96 = vmatprep.subr.mxu0 0.0
  %97 = vmatpush1.msra.mxu0 0.0
  %98 = vmatprep.subr.mxu0 0.0
  %99 = vmatpush1.msra.mxu0 0.0
  %100 = vmatprep.subr.mxu0 0.0
  %101 = vmatpush1.msra.mxu0 0.0
  %102 = vmatprep.subr.mxu0 0.0
  %103 = vmatpush1.msra.mxu0 0.0
  %104 = vmatprep.subr.mxu0 0.0
  %105 = vmatpush1.msra.mxu0 0.0
  %106 = vmatprep.subr.mxu0 0.0
  %107 = vmatpush1.msra.mxu0 0.0
  %108 = vmatprep.subr.mxu0 0.0
  %109 = vmatpush1.msra.mxu0 0.0
  %110 = vmatprep.subr.mxu0 0.0
  %111 = vmatpush1.msra.mxu0 0.0
  %112 = vmatprep.mubr.f32.mxu0 0.0
  %113 = vmatmul.mubr.f32.gmra.mrb[0].mxu0 %v43
  %v114 = vpop.f32.mrb[0].mxu0
  %v115 = vadd.f32 %v39, %v114
  %v116 = vpop.f32.mrb[0].mxu0
  %117 = vmatprep.mubr.f32.mxu0 0.0
  %118 = vmatmul.mubr.f32.gmra.mrb[0].mxu0 %v46
  %v119 = vpop.f32.mrb[0].mxu0
  %v120 = vadd.f32 %v39, %v119
  %v121 = vpop.f32.mrb[0].mxu0
  %122 = vdwg.mxu0
  %vm123 = vcmask 261120
  %124 = vst.msk [vmem:[#allocation2] sm:$0xff] %vm123, %v115
  %125 = vst.msk [vmem:[#allocation2 + $0x8] sm:$0xff] %vm123, %v120
  %v126 = vld [vmem:[%s6] sm:$0x1]
  %v127 = vld [vmem:[%s7] sm:$0x1]
  %v128 = vld [vmem:[#allocation2] sm:$0x1]
  %v130 = vsel %vm41, %v126, 0
  %132 = vmatprep.subr.mxu0 0.0
  %133 = vmatpush1.msra.mxu0 %v29
  %134 = vmatprep.subr.mxu0 0.0
  %135 = vmatpush1.msra.mxu0 0.0
  %136 = vmatprep.subr.mxu0 0.0
  %137 = vmatpush1.msra.mxu0 0.0
  %138 = vmatprep.subr.mxu0 0.0
  %139 = vmatpush1.msra.mxu0 0.0
  %140 = vmatprep.subr.mxu0 0.0
  %141 = vmatpush1.msra.mxu0 0.0
  %142 = vmatprep.subr.mxu0 0.0
  %143 = vmatpush1.msra.mxu0 0.0
  %144 = vmatprep.subr.mxu0 0.0
  %145 = vmatpush1.msra.mxu0 0.0
  %146 = vmatprep.subr.mxu0 0.0
  %147 = vmatpush1.msra.mxu0 0.0
  %148 = vmatprep.subr.mxu0 0.0
  %149 = vmatpush1.msra.mxu0 0.0
  %150 = vmatprep.subr.mxu0 0.0
  %151 = vmatpush1.msra.mxu0 0.0
  %152 = vmatprep.subr.mxu0 0.0
  %153 = vmatpush1.msra.mxu0 0.0
  %154 = vmatprep.subr.mxu0 0.0
  %155 = vmatpush1.msra.mxu0 0.0
  %156 = vmatprep.subr.mxu0 0.0
  %157 = vmatpush1.msra.mxu0 0.0
  %158 = vmatprep.subr.mxu0 0.0
  %159 = vmatpush1.msra.mxu0 0.0
  %160 = vmatprep.subr.mxu0 0.0
  %161 = vmatpush1.msra.mxu0 0.0
  %162 = vmatprep.subr.mxu0 0.0
  %163 = vmatpush1.msra.mxu0 0.0
  %164 = vmatprep.subr.mxu0 0.0
  %165 = vmatpush1.msra.mxu0 0.0
  %166 = vmatprep.subr.mxu0 0.0
  %167 = vmatpush1.msra.mxu0 0.0
  %168 = vmatprep.subr.mxu0 0.0
  %169 = vmatpush1.msra.mxu0 0.0
  %170 = vmatprep.subr.mxu0 0.0
  %171 = vmatpush1.msra.mxu0 0.0
  %172 = vmatprep.subr.mxu0 0.0
  %173 = vmatpush1.msra.mxu0 0.0
  %174 = vmatprep.subr.mxu0 0.0
  %175 = vmatpush1.msra.mxu0 0.0
  %176 = vmatprep.subr.mxu0 0.0
  %177 = vmatpush1.msra.mxu0 0.0
  %178 = vmatprep.subr.mxu0 0.0
  %179 = vmatpush1.msra.mxu0 0.0
  %180 = vmatprep.subr.mxu0 0.0
  %181 = vmatpush1.msra.mxu0 0.0
  %182 = vmatprep.subr.mxu0 0.0
  %183 = vmatpush1.msra.mxu0 0.0
  %184 = vmatprep.subr.mxu0 0.0
  %185 = vmatpush1.msra.mxu0 0.0
  %186 = vmatprep.subr.mxu0 0.0
  %187 = vmatpush1.msra.mxu0 0.0
  %188 = vmatprep.subr.mxu0 0.0
  %189 = vmatpush1.msra.mxu0 0.0
  %190 = vmatprep.subr.mxu0 0.0
  %191 = vmatpush1.msra.mxu0 0.0
  %192 = vmatprep.subr.mxu0 0.0
  %193 = vmatpush1.msra.mxu0 0.0
  %194 = vmatprep.subr.mxu0 0.0
  %195 = vmatpush1.msra.mxu0 0.0
  %196 = vmatprep.mubr.f32.mxu0 0.0
  %197 = vmatmul.mubr.f32.gmra.mrb[0].mxu0 %v130
  %v198 = vpop.f32.mrb[0].mxu0
  %v199 = vadd.f32 0.0, %v198
  %v200 = vpop.f32.mrb[0].mxu0
  %201 = vdwg.mxu0
  %v202 = vadd.f32 %v128, %v199
  %v203 = vxor.u32 %v202, 2147483648
  %v204 = vmul.f32 %v203, 1.442695
  %v205 = vpow.pop %v204
  %v206 = vadd.f32 %v205, 1.0
  %v207 = vrcp.pop %v206
  %v208 = vmul.f32 1.0, %v207
  %v209 = vtanh.pop %v202
  %v211 = vlaneseq
  %v212 = vshrl.u32 %v211, 7
  %v213 = vsub.s32 0, %v212
  %v214 = vrot.slane %v127, %v213
  %215 = vrot.lane.b32.xlu0 %v214, 8
  %v216 = vpop.permute.xlu0 %215
  %v218 = vmul.f32 %v208, %v216
  %220 = vrot.lane.b32.xlu0 %v209, 104
  %v221 = vpop.permute.xlu0 %220
  %v223 = vmul.f32 %v208, %v221
  %225 = vrot.lane.b32.xlu0 %v223, 8
  %v226 = vpop.permute.xlu0 %225
  %v228 = vadd.f32 %v218, %v226
  %v229 = vtanh.pop %v228
  %231 = vrot.lane.b32.xlu0 %v229, 8
  %v232 = vpop.permute.xlu0 %231
  %v234 = vmul.f32 %v208, %v232
  %236 = vrot.lane.b32.xlu0 %v234, 112
  %v237 = vpop.permute.xlu0 %236
  %vm239 = vcmask 57344
  %240 = vst.msk [vmem:[#allocation3] sm:$0x1] %vm239, %v237
  %v241 = vld [vmem:[#allocation2 + $0x1] sm:$0x1]
  %v242 = vsel %vm41, %v237, 0
  %244 = vmatprep.subr.mxu0 0.0
  %245 = vmatpush1.msra.mxu0 %v29
  %246 = vmatprep.subr.mxu0 0.0
  %247 = vmatpush1.msra.mxu0 0.0
  %248 = vmatprep.subr.mxu0 0.0
  %249 = vmatpush1.msra.mxu0 0.0
  %250 = vmatprep.subr.mxu0 0.0
  %251 = vmatpush1.msra.mxu0 0.0
  %252 = vmatprep.subr.mxu0 0.0
  %253 = vmatpush1.msra.mxu0 0.0
  %254 = vmatprep.subr.mxu0 0.0
  %255 = vmatpush1.msra.mxu0 0.0
  %256 = vmatprep.subr.mxu0 0.0
  %257 = vmatpush1.msra.mxu0 0.0
  %258 = vmatprep.subr.mxu0 0.0
  %259 = vmatpush1.msra.mxu0 0.0
  %260 = vmatprep.subr.mxu0 0.0
  %261 = vmatpush1.msra.mxu0 0.0
  %262 = vmatprep.subr.mxu0 0.0
  %263 = vmatpush1.msra.mxu0 0.0
  %264 = vmatprep.subr.mxu0 0.0
  %265 = vmatpush1.msra.mxu0 0.0
  %266 = vmatprep.subr.mxu0 0.0
  %267 = vmatpush1.msra.mxu0 0.0
  %268 = vmatprep.subr.mxu0 0.0
  %269 = vmatpush1.msra.mxu0 0.0
  %270 = vmatprep.subr.mxu0 0.0
  %271 = vmatpush1.msra.mxu0 0.0
  %272 = vmatprep.subr.mxu0 0.0
  %273 = vmatpush1.msra.mxu0 0.0
  %274 = vmatprep.subr.mxu0 0.0
  %275 = vmatpush1.msra.mxu0 0.0
  %276 = vmatprep.subr.mxu0 0.0
  %277 = vmatpush1.msra.mxu0 0.0
  %278 = vmatprep.subr.mxu0 0.0
  %279 = vmatpush1.msra.mxu0 0.0
  %280 = vmatprep.subr.mxu0 0.0
  %281 = vmatpush1.msra.mxu0 0.0
  %282 = vmatprep.subr.mxu0 0.0
  %283 = vmatpush1.msra.mxu0 0.0
  %284 = vmatprep.subr.mxu0 0.0
  %285 = vmatpush1.msra.mxu0 0.0
  %286 = vmatprep.subr.mxu0 0.0
  %287 = vmatpush1.msra.mxu0 0.0
  %288 = vmatprep.subr.mxu0 0.0
  %289 = vmatpush1.msra.mxu0 0.0
  %290 = vmatprep.subr.mxu0 0.0
  %291 = vmatpush1.msra.mxu0 0.0
  %292 = vmatprep.subr.mxu0 0.0
  %293 = vmatpush1.msra.mxu0 0.0
  %294 = vmatprep.subr.mxu0 0.0
  %295 = vmatpush1.msra.mxu0 0.0
  %296 = vmatprep.subr.mxu0 0.0
  %297 = vmatpush1.msra.mxu0 0.0
  %298 = vmatprep.subr.mxu0 0.0
  %299 = vmatpush1.msra.mxu0 0.0
  %300 = vmatprep.subr.mxu0 0.0
  %301 = vmatpush1.msra.mxu0 0.0
  %302 = vmatprep.subr.mxu0 0.0
  %303 = vmatpush1.msra.mxu0 0.0
  %304 = vmatprep.subr.mxu0 0.0
  %305 = vmatpush1.msra.mxu0 0.0
  %306 = vmatprep.subr.mxu0 0.0
  %307 = vmatpush1.msra.mxu0 0.0
  %308 = vmatprep.mubr.f32.mxu0 0.0
  %309 = vmatmul.mubr.f32.gmra.mrb[0].mxu0 %v242
  %v310 = vpop.f32.mrb[0].mxu0
  %v311 = vadd.f32 0.0, %v310
  %v312 = vpop.f32.mrb[0].mxu0
  %313 = vdwg.mxu0
  %v314 = vadd.f32 %v241, %v311
  %v315 = vxor.u32 %v314, 2147483648
  %v316 = vmul.f32 %v315, 1.442695
  %v317 = vpow.pop %v316
  %v318 = vadd.f32 %v317, 1.0
  %v319 = vrcp.pop %v318
  %v320 = vmul.f32 1.0, %v319
  %v321 = vtanh.pop %v314
  %v322 = vmul.f32 %v320, %v228
  %324 = vrot.lane.b32.xlu0 %v321, 104
  %v325 = vpop.permute.xlu0 %324
  %v327 = vmul.f32 %v320, %v325
  %329 = vrot.lane.b32.xlu0 %v327, 8
  %v330 = vpop.permute.xlu0 %329
  %v332 = vadd.f32 %v322, %v330
  %v333 = vtanh.pop %v332
  %335 = vrot.lane.b32.xlu0 %v333, 8
  %v336 = vpop.permute.xlu0 %335
  %v338 = vmul.f32 %v320, %v336
  %340 = vrot.lane.b32.xlu0 %v338, 112
  %v341 = vpop.permute.xlu0 %340
  %343 = vst.msk [vmem:[#allocation3 + $0x1] sm:$0x1] %vm239, %v341
  %v344 = vld [vmem:[#allocation2 + $0x2] sm:$0x1]
  %v345 = vsel %vm41, %v341, 0
  %347 = vmatprep.subr.mxu0 0.0
  %348 = vmatpush1.msra.mxu0 %v29
  %349 = vmatprep.subr.mxu0 0.0
  %350 = vmatpush1.msra.mxu0 0.0
  %351 = vmatprep.subr.mxu0 0.0
  %352 = vmatpush1.msra.mxu0 0.0
  %353 = vmatprep.subr.mxu0 0.0
  %354 = vmatpush1.msra.mxu0 0.0
  %355 = vmatprep.subr.mxu0 0.0
  %356 = vmatpush1.msra.mxu0 0.0
  %357 = vmatprep.subr.mxu0 0.0
  %358 = vmatpush1.msra.mxu0 0.0
  %359 = vmatprep.subr.mxu0 0.0
  %360 = vmatpush1.msra.mxu0 0.0
  %361 = vmatprep.subr.mxu0 0.0
  %362 = vmatpush1.msra.mxu0 0.0
  %363 = vmatprep.subr.mxu0 0.0
  %364 = vmatpush1.msra.mxu0 0.0
  %365 = vmatprep.subr.mxu0 0.0
  %366 = vmatpush1.msra.mxu0 0.0
  %367 = vmatprep.subr.mxu0 0.0
  %368 = vmatpush1.msra.mxu0 0.0
  %369 = vmatprep.subr.mxu0 0.0
  %370 = vmatpush1.msra.mxu0 0.0
  %371 = vmatprep.subr.mxu0 0.0
  %372 = vmatpush1.msra.mxu0 0.0
  %373 = vmatprep.subr.mxu0 0.0
  %374 = vmatpush1.msra.mxu0 0.0
  %375 = vmatprep.subr.mxu0 0.0
  %376 = vmatpush1.msra.mxu0 0.0
  %377 = vmatprep.subr.mxu0 0.0
  %378 = vmatpush1.msra.mxu0 0.0
  %379 = vmatprep.subr.mxu0 0.0
  %380 = vmatpush1.msra.mxu0 0.0
  %381 = vmatprep.subr.mxu0 0.0
  %382 = vmatpush1.msra.mxu0 0.0
  %383 = vmatprep.subr.mxu0 0.0
  %384 = vmatpush1.msra.mxu0 0.0
  %385 = vmatprep.subr.mxu0 0.0
  %386 = vmatpush1.msra.mxu0 0.0
  %387 = vmatprep.subr.mxu0 0.0
  %388 = vmatpush1.msra.mxu0 0.0
  %389 = vmatprep.subr.mxu0 0.0
  %390 = vmatpush1.msra.mxu0 0.0
  %391 = vmatprep.subr.mxu0 0.0
  %392 = vmatpush1.msra.mxu0 0.0
  %393 = vmatprep.subr.mxu0 0.0
  %394 = vmatpush1.msra.mxu0 0.0
  %395 = vmatprep.subr.mxu0 0.0
  %396 = vmatpush1.msra.mxu0 0.0
  %397 = vmatprep.subr.mxu0 0.0
  %398 = vmatpush1.msra.mxu0 0.0
  %399 = vmatprep.subr.mxu0 0.0
  %400 = vmatpush1.msra.mxu0 0.0
  %401 = vmatprep.subr.mxu0 0.0
  %402 = vmatpush1.msra.mxu0 0.0
  %403 = vmatprep.subr.mxu0 0.0
  %404 = vmatpush1.msra.mxu0 0.0
  %405 = vmatprep.subr.mxu0 0.0
  %406 = vmatpush1.msra.mxu0 0.0
  %407 = vmatprep.subr.mxu0 0.0
  %408 = vmatpush1.msra.mxu0 0.0
  %409 = vmatprep.subr.mxu0 0.0
  %410 = vmatpush1.msra.mxu0 0.0
  %411 = vmatprep.mubr.f32.mxu0 0.0
  %412 = vmatmul.mubr.f32.gmra.mrb[0].mxu0 %v345
  %v413 = vpop.f32.mrb[0].mxu0
  %v414 = vadd.f32 0.0, %v413
  %v415 = vpop.f32.mrb[0].mxu0
  %416 = vdwg.mxu0
  %v417 = vadd.f32 %v344, %v414
  %v418 = vxor.u32 %v417, 2147483648
  %v419 = vmul.f32 %v418, 1.442695
  %v420 = vpow.pop %v419
  %v421 = vadd.f32 %v420, 1.0
  %v422 = vrcp.pop %v421
  %v423 = vmul.f32 1.0, %v422
  %v424 = vtanh.pop %v417
  %v425 = vmul.f32 %v423, %v332
  %427 = vrot.lane.b32.xlu0 %v424, 104
  %v428 = vpop.permute.xlu0 %427
  %v430 = vmul.f32 %v423, %v428
  %432 = vrot.lane.b32.xlu0 %v430, 8
  %v433 = vpop.permute.xlu0 %432
  %v435 = vadd.f32 %v425, %v433
  %v436 = vtanh.pop %v435
  %438 = vrot.lane.b32.xlu0 %v436, 8
  %v439 = vpop.permute.xlu0 %438
  %v441 = vmul.f32 %v423, %v439
  %443 = vrot.lane.b32.xlu0 %v441, 112
  %v444 = vpop.permute.xlu0 %443
  %446 = vst.msk [vmem:[#allocation3 + $0x2] sm:$0x1] %vm239, %v444
  %v447 = vld [vmem:[#allocation2 + $0x3] sm:$0x1]
  %v448 = vsel %vm41, %v444, 0
  %450 = vmatprep.subr.mxu0 0.0
  %451 = vmatpush1.msra.mxu0 %v29
  %452 = vmatprep.subr.mxu0 0.0
  %453 = vmatpush1.msra.mxu0 0.0
  %454 = vmatprep.subr.mxu0 0.0
  %455 = vmatpush1.msra.mxu0 0.0
  %456 = vmatprep.subr.mxu0 0.0
  %457 = vmatpush1.msra.mxu0 0.0
  %458 = vmatprep.subr.mxu0 0.0
  %459 = vmatpush1.msra.mxu0 0.0
  %460 = vmatprep.subr.mxu0 0.0
  %461 = vmatpush1.msra.mxu0 0.0
  %462 = vmatprep.subr.mxu0 0.0
  %463 = vmatpush1.msra.mxu0 0.0
  %464 = vmatprep.subr.mxu0 0.0
  %465 = vmatpush1.msra.mxu0 0.0
  %466 = vmatprep.subr.mxu0 0.0
  %467 = vmatpush1.msra.mxu0 0.0
  %468 = vmatprep.subr.mxu0 0.0
  %469 = vmatpush1.msra.mxu0 0.0
  %470 = vmatprep.subr.mxu0 0.0
  %471 = vmatpush1.msra.mxu0 0.0
  %472 = vmatprep.subr.mxu0 0.0
  %473 = vmatpush1.msra.mxu0 0.0
  %474 = vmatprep.subr.mxu0 0.0
  %475 = vmatpush1.msra.mxu0 0.0
  %476 = vmatprep.subr.mxu0 0.0
  %477 = vmatpush1.msra.mxu0 0.0
  %478 = vmatprep.subr.mxu0 0.0
  %479 = vmatpush1.msra.mxu0 0.0
  %480 = vmatprep.subr.mxu0 0.0
  %481 = vmatpush1.msra.mxu0 0.0
  %482 = vmatprep.subr.mxu0 0.0
  %483 = vmatpush1.msra.mxu0 0.0
  %484 = vmatprep.subr.mxu0 0.0
  %485 = vmatpush1.msra.mxu0 0.0
  %486 = vmatprep.subr.mxu0 0.0
  %487 = vmatpush1.msra.mxu0 0.0
  %488 = vmatprep.subr.mxu0 0.0
  %489 = vmatpush1.msra.mxu0 0.0
  %490 = vmatprep.subr.mxu0 0.0
  %491 = vmatpush1.msra.mxu0 0.0
  %492 = vmatprep.subr.mxu0 0.0
  %493 = vmatpush1.msra.mxu0 0.0
  %494 = vmatprep.subr.mxu0 0.0
  %495 = vmatpush1.msra.mxu0 0.0
  %496 = vmatprep.subr.mxu0 0.0
  %497 = vmatpush1.msra.mxu0 0.0
  %498 = vmatprep.subr.mxu0 0.0
  %499 = vmatpush1.msra.mxu0 0.0
  %500 = vmatprep.subr.mxu0 0.0
  %501 = vmatpush1.msra.mxu0 0.0
  %502 = vmatprep.subr.mxu0 0.0
  %503 = vmatpush1.msra.mxu0 0.0
  %504 = vmatprep.subr.mxu0 0.0
  %505 = vmatpush1.msra.mxu0 0.0
  %506 = vmatprep.subr.mxu0 0.0
  %507 = vmatpush1.msra.mxu0 0.0
  %508 = vmatprep.subr.mxu0 0.0
  %509 = vmatpush1.msra.mxu0 0.0
  %510 = vmatprep.subr.mxu0 0.0
  %511 = vmatpush1.msra.mxu0 0.0
  %512 = vmatprep.subr.mxu0 0.0
  %513 = vmatpush1.msra.mxu0 0.0
  %514 = vmatprep.mubr.f32.mxu0 0.0
  %515 = vmatmul.mubr.f32.gmra.mrb[0].mxu0 %v448
  %v516 = vpop.f32.mrb[0].mxu0
  %v517 = vadd.f32 0.0, %v516
  %v518 = vpop.f32.mrb[0].mxu0
  %519 = vdwg.mxu0
  %v520 = vadd.f32 %v447, %v517
  %v521 = vxor.u32 %v520, 2147483648
  %v522 = vmul.f32 %v521, 1.442695
  %v523 = vpow.pop %v522
  %v524 = vadd.f32 %v523, 1.0
  %v525 = vrcp.pop %v524
  %v526 = vmul.f32 1.0, %v525
  %v527 = vtanh.pop %v520
  %v528 = vmul.f32 %v526, %v435
  %530 = vrot.lane.b32.xlu0 %v527, 104
  %v531 = vpop.permute.xlu0 %530
  %v533 = vmul.f32 %v526, %v531
  %535 = vrot.lane.b32.xlu0 %v533, 8
  %v536 = vpop.permute.xlu0 %535
  %v538 = vadd.f32 %v528, %v536
  %v539 = vtanh.pop %v538
  %541 = vrot.lane.b32.xlu0 %v539, 8
  %v542 = vpop.permute.xlu0 %541
  %v544 = vmul.f32 %v526, %v542
  %546 = vrot.lane.b32.xlu0 %v544, 112
  %v547 = vpop.permute.xlu0 %546
  %549 = vst.msk [vmem:[#allocation3 + $0x3] sm:$0x1] %vm239, %v547
  %v550 = vld [vmem:[#allocation2 + $0x4] sm:$0x1]
  %v551 = vsel %vm41, %v547, 0
  %553 = vmatprep.subr.mxu0 0.0
  %554 = vmatpush1.msra.mxu0 %v29
  %555 = vmatprep.subr.mxu0 0.0
  %556 = vmatpush1.msra.mxu0 0.0
  %557 = vmatprep.subr.mxu0 0.0
  %558 = vmatpush1.msra.mxu0 0.0
  %559 = vmatprep.subr.mxu0 0.0
  %560 = vmatpush1.msra.mxu0 0.0
  %561 = vmatprep.subr.mxu0 0.0
  %562 = vmatpush1.msra.mxu0 0.0
  %563 = vmatprep.subr.mxu0 0.0
  %564 = vmatpush1.msra.mxu0 0.0
  %565 = vmatprep.subr.mxu0 0.0
  %566 = vmatpush1.msra.mxu0 0.0
  %567 = vmatprep.subr.mxu0 0.0
  %568 = vmatpush1.msra.mxu0 0.0
  %569 = vmatprep.subr.mxu0 0.0
  %570 = vmatpush1.msra.mxu0 0.0
  %571 = vmatprep.subr.mxu0 0.0
  %572 = vmatpush1.msra.mxu0 0.0
  %573 = vmatprep.subr.mxu0 0.0
  %574 = vmatpush1.msra.mxu0 0.0
  %575 = vmatprep.subr.mxu0 0.0
  %576 = vmatpush1.msra.mxu0 0.0
  %577 = vmatprep.subr.mxu0 0.0
  %578 = vmatpush1.msra.mxu0 0.0
  %579 = vmatprep.subr.mxu0 0.0
  %580 = vmatpush1.msra.mxu0 0.0
  %581 = vmatprep.subr.mxu0 0.0
  %582 = vmatpush1.msra.mxu0 0.0
  %583 = vmatprep.subr.mxu0 0.0
  %584 = vmatpush1.msra.mxu0 0.0
  %585 = vmatprep.subr.mxu0 0.0
  %586 = vmatpush1.msra.mxu0 0.0
  %587 = vmatprep.subr.mxu0 0.0
  %588 = vmatpush1.msra.mxu0 0.0
  %589 = vmatprep.subr.mxu0 0.0
  %590 = vmatpush1.msra.mxu0 0.0
  %591 = vmatprep.subr.mxu0 0.0
  %592 = vmatpush1.msra.mxu0 0.0
  %593 = vmatprep.subr.mxu0 0.0
  %594 = vmatpush1.msra.mxu0 0.0
  %595 = vmatprep.subr.mxu0 0.0
  %596 = vmatpush1.msra.mxu0 0.0
  %597 = vmatprep.subr.mxu0 0.0
  %598 = vmatpush1.msra.mxu0 0.0
  %599 = vmatprep.subr.mxu0 0.0
  %600 = vmatpush1.msra.mxu0 0.0
  %601 = vmatprep.subr.mxu0 0.0
  %602 = vmatpush1.msra.mxu0 0.0
  %603 = vmatprep.subr.mxu0 0.0
  %604 = vmatpush1.msra.mxu0 0.0
  %605 = vmatprep.subr.mxu0 0.0
  %606 = vmatpush1.msra.mxu0 0.0
  %607 = vmatprep.subr.mxu0 0.0
  %608 = vmatpush1.msra.mxu0 0.0
  %609 = vmatprep.subr.mxu0 0.0
  %610 = vmatpush1.msra.mxu0 0.0
  %611 = vmatprep.subr.mxu0 0.0
  %612 = vmatpush1.msra.mxu0 0.0
  %613 = vmatprep.subr.mxu0 0.0
  %614 = vmatpush1.msra.mxu0 0.0
  %615 = vmatprep.subr.mxu0 0.0
  %616 = vmatpush1.msra.mxu0 0.0
  %617 = vmatprep.mubr.f32.mxu0 0.0
  %618 = vmatmul.mubr.f32.gmra.mrb[0].mxu0 %v551
  %v619 = vpop.f32.mrb[0].mxu0
  %v620 = vadd.f32 0.0, %v619
  %v621 = vpop.f32.mrb[0].mxu0
  %622 = vdwg.mxu0
  %v623 = vadd.f32 %v550, %v620
  %v624 = vxor.u32 %v623, 2147483648
  %v625 = vmul.f32 %v624, 1.442695
  %v626 = vpow.pop %v625
  %v627 = vadd.f32 %v626, 1.0
  %v628 = vrcp.pop %v627
  %v629 = vmul.f32 1.0, %v628
  %v630 = vtanh.pop %v623
  %v631 = vmul.f32 %v629, %v538
  %633 = vrot.lane.b32.xlu0 %v630, 104
  %v634 = vpop.permute.xlu0 %633
  %v636 = vmul.f32 %v629, %v634
  %638 = vrot.lane.b32.xlu0 %v636, 8
  %v639 = vpop.permute.xlu0 %638
  %v641 = vadd.f32 %v631, %v639
  %v642 = vtanh.pop %v641
  %644 = vrot.lane.b32.xlu0 %v642, 8
  %v645 = vpop.permute.xlu0 %644
  %v647 = vmul.f32 %v629, %v645
  %649 = vrot.lane.b32.xlu0 %v647, 112
  %v650 = vpop.permute.xlu0 %649
  %652 = vst.msk [vmem:[#allocation3 + $0x4] sm:$0x1] %vm239, %v650
  %v653 = vld [vmem:[#allocation2 + $0x5] sm:$0x1]
  %v654 = vsel %vm41, %v650, 0
  %656 = vmatprep.subr.mxu0 0.0
  %657 = vmatpush1.msra.mxu0 %v29
  %658 = vmatprep.subr.mxu0 0.0
  %659 = vmatpush1.msra.mxu0 0.0
  %660 = vmatprep.subr.mxu0 0.0
  %661 = vmatpush1.msra.mxu0 0.0
  %662 = vmatprep.subr.mxu0 0.0
  %663 = vmatpush1.msra.mxu0 0.0
  %664 = vmatprep.subr.mxu0 0.0
  %665 = vmatpush1.msra.mxu0 0.0
  %666 = vmatprep.subr.mxu0 0.0
  %667 = vmatpush1.msra.mxu0 0.0
  %668 = vmatprep.subr.mxu0 0.0
  %669 = vmatpush1.msra.mxu0 0.0
  %670 = vmatprep.subr.mxu0 0.0
  %671 = vmatpush1.msra.mxu0 0.0
  %672 = vmatprep.subr.mxu0 0.0
  %673 = vmatpush1.msra.mxu0 0.0
  %674 = vmatprep.subr.mxu0 0.0
  %675 = vmatpush1.msra.mxu0 0.0
  %676 = vmatprep.subr.mxu0 0.0
  %677 = vmatpush1.msra.mxu0 0.0
  %678 = vmatprep.subr.mxu0 0.0
  %679 = vmatpush1.msra.mxu0 0.0
  %680 = vmatprep.subr.mxu0 0.0
  %681 = vmatpush1.msra.mxu0 0.0
  %682 = vmatprep.subr.mxu0 0.0
  %683 = vmatpush1.msra.mxu0 0.0
  %684 = vmatprep.subr.mxu0 0.0
  %685 = vmatpush1.msra.mxu0 0.0
  %686 = vmatprep.subr.mxu0 0.0
  %687 = vmatpush1.msra.mxu0 0.0
  %688 = vmatprep.subr.mxu0 0.0
  %689 = vmatpush1.msra.mxu0 0.0
  %690 = vmatprep.subr.mxu0 0.0
  %691 = vmatpush1.msra.mxu0 0.0
  %692 = vmatprep.subr.mxu0 0.0
  %693 = vmatpush1.msra.mxu0 0.0
  %694 = vmatprep.subr.mxu0 0.0
  %695 = vmatpush1.msra.mxu0 0.0
  %696 = vmatprep.subr.mxu0 0.0
  %697 = vmatpush1.msra.mxu0 0.0
  %698 = vmatprep.subr.mxu0 0.0
  %699 = vmatpush1.msra.mxu0 0.0
  %700 = vmatprep.subr.mxu0 0.0
  %701 = vmatpush1.msra.mxu0 0.0
  %702 = vmatprep.subr.mxu0 0.0
  %703 = vmatpush1.msra.mxu0 0.0
  %704 = vmatprep.subr.mxu0 0.0
  %705 = vmatpush1.msra.mxu0 0.0
  %706 = vmatprep.subr.mxu0 0.0
  %707 = vmatpush1.msra.mxu0 0.0
  %708 = vmatprep.subr.mxu0 0.0
  %709 = vmatpush1.msra.mxu0 0.0
  %710 = vmatprep.subr.mxu0 0.0
  %711 = vmatpush1.msra.mxu0 0.0
  %712 = vmatprep.subr.mxu0 0.0
  %713 = vmatpush1.msra.mxu0 0.0
  %714 = vmatprep.subr.mxu0 0.0
  %715 = vmatpush1.msra.mxu0 0.0
  %716 = vmatprep.subr.mxu0 0.0
  %717 = vmatpush1.msra.mxu0 0.0
  %718 = vmatprep.subr.mxu0 0.0
  %719 = vmatpush1.msra.mxu0 0.0
  %720 = vmatprep.mubr.f32.mxu0 0.0
  %721 = vmatmul.mubr.f32.gmra.mrb[0].mxu0 %v654
  %v722 = vpop.f32.mrb[0].mxu0
  %v723 = vadd.f32 0.0, %v722
  %v724 = vpop.f32.mrb[0].mxu0
  %725 = vdwg.mxu0
  %v726 = vadd.f32 %v653, %v723
  %v727 = vxor.u32 %v726, 2147483648
  %v728 = vmul.f32 %v727, 1.442695
  %v729 = vpow.pop %v728
  %v730 = vadd.f32 %v729, 1.0
  %v731 = vrcp.pop %v730
  %v732 = vmul.f32 1.0, %v731
  %v733 = vtanh.pop %v726
  %v734 = vmul.f32 %v732, %v641
  %736 = vrot.lane.b32.xlu0 %v733, 104
  %v737 = vpop.permute.xlu0 %736
  %v739 = vmul.f32 %v732, %v737
  %741 = vrot.lane.b32.xlu0 %v739, 8
  %v742 = vpop.permute.xlu0 %741
  %v744 = vadd.f32 %v734, %v742
  %v745 = vtanh.pop %v744
  %747 = vrot.lane.b32.xlu0 %v745, 8
  %v748 = vpop.permute.xlu0 %747
  %v750 = vmul.f32 %v732, %v748
  %752 = vrot.lane.b32.xlu0 %v750, 112
  %v753 = vpop.permute.xlu0 %752
  %755 = vst.msk [vmem:[#allocation3 + $0x5] sm:$0x1] %vm239, %v753
  %v756 = vld [vmem:[#allocation2 + $0x6] sm:$0x1]
  %v757 = vsel %vm41, %v753, 0
  %759 = vmatprep.subr.mxu0 0.0
  %760 = vmatpush1.msra.mxu0 %v29
  %761 = vmatprep.subr.mxu0 0.0
  %762 = vmatpush1.msra.mxu0 0.0
  %763 = vmatprep.subr.mxu0 0.0
  %764 = vmatpush1.msra.mxu0 0.0
  %765 = vmatprep.subr.mxu0 0.0
  %766 = vmatpush1.msra.mxu0 0.0
  %767 = vmatprep.subr.mxu0 0.0
  %768 = vmatpush1.msra.mxu0 0.0
  %769 = vmatprep.subr.mxu0 0.0
  %770 = vmatpush1.msra.mxu0 0.0
  %771 = vmatprep.subr.mxu0 0.0
  %772 = vmatpush1.msra.mxu0 0.0
  %773 = vmatprep.subr.mxu0 0.0
  %774 = vmatpush1.msra.mxu0 0.0
  %775 = vmatprep.subr.mxu0 0.0
  %776 = vmatpush1.msra.mxu0 0.0
  %777 = vmatprep.subr.mxu0 0.0
  %778 = vmatpush1.msra.mxu0 0.0
  %779 = vmatprep.subr.mxu0 0.0
  %780 = vmatpush1.msra.mxu0 0.0
  %781 = vmatprep.subr.mxu0 0.0
  %782 = vmatpush1.msra.mxu0 0.0
  %783 = vmatprep.subr.mxu0 0.0
  %784 = vmatpush1.msra.mxu0 0.0
  %785 = vmatprep.subr.mxu0 0.0
  %786 = vmatpush1.msra.mxu0 0.0
  %787 = vmatprep.subr.mxu0 0.0
  %788 = vmatpush1.msra.mxu0 0.0
  %789 = vmatprep.subr.mxu0 0.0
  %790 = vmatpush1.msra.mxu0 0.0
  %791 = vmatprep.subr.mxu0 0.0
  %792 = vmatpush1.msra.mxu0 0.0
  %793 = vmatprep.subr.mxu0 0.0
  %794 = vmatpush1.msra.mxu0 0.0
  %795 = vmatprep.subr.mxu0 0.0
  %796 = vmatpush1.msra.mxu0 0.0
  %797 = vmatprep.subr.mxu0 0.0
  %798 = vmatpush1.msra.mxu0 0.0
  %799 = vmatprep.subr.mxu0 0.0
  %800 = vmatpush1.msra.mxu0 0.0
  %801 = vmatprep.subr.mxu0 0.0
  %802 = vmatpush1.msra.mxu0 0.0
  %803 = vmatprep.subr.mxu0 0.0
  %804 = vmatpush1.msra.mxu0 0.0
  %805 = vmatprep.subr.mxu0 0.0
  %806 = vmatpush1.msra.mxu0 0.0
  %807 = vmatprep.subr.mxu0 0.0
  %808 = vmatpush1.msra.mxu0 0.0
  %809 = vmatprep.subr.mxu0 0.0
  %810 = vmatpush1.msra.mxu0 0.0
  %811 = vmatprep.subr.mxu0 0.0
  %812 = vmatpush1.msra.mxu0 0.0
  %813 = vmatprep.subr.mxu0 0.0
  %814 = vmatpush1.msra.mxu0 0.0
  %815 = vmatprep.subr.mxu0 0.0
  %816 = vmatpush1.msra.mxu0 0.0
  %817 = vmatprep.subr.mxu0 0.0
  %818 = vmatpush1.msra.mxu0 0.0
  %819 = vmatprep.subr.mxu0 0.0
  %820 = vmatpush1.msra.mxu0 0.0
  %821 = vmatprep.subr.mxu0 0.0
  %822 = vmatpush1.msra.mxu0 0.0
  %823 = vmatprep.mubr.f32.mxu0 0.0
  %824 = vmatmul.mubr.f32.gmra.mrb[0].mxu0 %v757
  %v825 = vpop.f32.mrb[0].mxu0
  %v826 = vadd.f32 0.0, %v825
  %v827 = vpop.f32.mrb[0].mxu0
  %828 = vdwg.mxu0
  %v829 = vadd.f32 %v756, %v826
  %v830 = vxor.u32 %v829, 2147483648
  %v831 = vmul.f32 %v830, 1.442695
  %v832 = vpow.pop %v831
  %v833 = vadd.f32 %v832, 1.0
  %v834 = vrcp.pop %v833
  %v835 = vmul.f32 1.0, %v834
  %v836 = vtanh.pop %v829
  %v837 = vmul.f32 %v835, %v744
  %839 = vrot.lane.b32.xlu0 %v836, 104
  %v840 = vpop.permute.xlu0 %839
  %v842 = vmul.f32 %v835, %v840
  %844 = vrot.lane.b32.xlu0 %v842, 8
  %v845 = vpop.permute.xlu0 %844
  %v847 = vadd.f32 %v837, %v845
  %v848 = vtanh.pop %v847
  %850 = vrot.lane.b32.xlu0 %v848, 8
  %v851 = vpop.permute.xlu0 %850
  %v853 = vmul.f32 %v835, %v851
  %855 = vrot.lane.b32.xlu0 %v853, 112
  %v856 = vpop.permute.xlu0 %855
  %858 = vst.msk [vmem:[#allocation3 + $0x6] sm:$0x1] %vm239, %v856
  %v859 = vld [vmem:[#allocation2 + $0x7] sm:$0x1]
  %v860 = vsel %vm41, %v856, 0
  %862 = vmatprep.subr.mxu0 0.0
  %863 = vmatpush1.msra.mxu0 %v29
  %864 = vmatprep.subr.mxu0 0.0
  %865 = vmatpush1.msra.mxu0 0.0
  %866 = vmatprep.subr.mxu0 0.0
  %867 = vmatpush1.msra.mxu0 0.0
  %868 = vmatprep.subr.mxu0 0.0
  %869 = vmatpush1.msra.mxu0 0.0
  %870 = vmatprep.subr.mxu0 0.0
  %871 = vmatpush1.msra.mxu0 0.0
  %872 = vmatprep.subr.mxu0 0.0
  %873 = vmatpush1.msra.mxu0 0.0
  %874 = vmatprep.subr.mxu0 0.0
  %875 = vmatpush1.msra.mxu0 0.0
  %876 = vmatprep.subr.mxu0 0.0
  %877 = vmatpush1.msra.mxu0 0.0
  %878 = vmatprep.subr.mxu0 0.0
  %879 = vmatpush1.msra.mxu0 0.0
  %880 = vmatprep.subr.mxu0 0.0
  %881 = vmatpush1.msra.mxu0 0.0
  %882 = vmatprep.subr.mxu0 0.0
  %883 = vmatpush1.msra.mxu0 0.0
  %884 = vmatprep.subr.mxu0 0.0
  %885 = vmatpush1.msra.mxu0 0.0
  %886 = vmatprep.subr.mxu0 0.0
  %887 = vmatpush1.msra.mxu0 0.0
  %888 = vmatprep.subr.mxu0 0.0
  %889 = vmatpush1.msra.mxu0 0.0
  %890 = vmatprep.subr.mxu0 0.0
  %891 = vmatpush1.msra.mxu0 0.0
  %892 = vmatprep.subr.mxu0 0.0
  %893 = vmatpush1.msra.mxu0 0.0
  %894 = vmatprep.subr.mxu0 0.0
  %895 = vmatpush1.msra.mxu0 0.0
  %896 = vmatprep.subr.mxu0 0.0
  %897 = vmatpush1.msra.mxu0 0.0
  %898 = vmatprep.subr.mxu0 0.0
  %899 = vmatpush1.msra.mxu0 0.0
  %900 = vmatprep.subr.mxu0 0.0
  %901 = vmatpush1.msra.mxu0 0.0
  %902 = vmatprep.subr.mxu0 0.0
  %903 = vmatpush1.msra.mxu0 0.0
  %904 = vmatprep.subr.mxu0 0.0
  %905 = vmatpush1.msra.mxu0 0.0
  %906 = vmatprep.subr.mxu0 0.0
  %907 = vmatpush1.msra.mxu0 0.0
  %908 = vmatprep.subr.mxu0 0.0
  %909 = vmatpush1.msra.mxu0 0.0
  %910 = vmatprep.subr.mxu0 0.0
  %911 = vmatpush1.msra.mxu0 0.0
  %912 = vmatprep.subr.mxu0 0.0
  %913 = vmatpush1.msra.mxu0 0.0
  %914 = vmatprep.subr.mxu0 0.0
  %915 = vmatpush1.msra.mxu0 0.0
  %916 = vmatprep.subr.mxu0 0.0
  %917 = vmatpush1.msra.mxu0 0.0
  %918 = vmatprep.subr.mxu0 0.0
  %919 = vmatpush1.msra.mxu0 0.0
  %920 = vmatprep.subr.mxu0 0.0
  %921 = vmatpush1.msra.mxu0 0.0
  %922 = vmatprep.subr.mxu0 0.0
  %923 = vmatpush1.msra.mxu0 0.0
  %924 = vmatprep.subr.mxu0 0.0
  %925 = vmatpush1.msra.mxu0 0.0
  %926 = vmatprep.mubr.f32.mxu0 0.0
  %927 = vmatmul.mubr.f32.gmra.mrb[0].mxu0 %v860
  %v928 = vpop.f32.mrb[0].mxu0
  %v929 = vadd.f32 0.0, %v928
  %v930 = vpop.f32.mrb[0].mxu0
  %931 = vdwg.mxu0
  %v932 = vadd.f32 %v859, %v929
  %v933 = vxor.u32 %v932, 2147483648
  %v934 = vmul.f32 %v933, 1.442695
  %v935 = vpow.pop %v934
  %v936 = vadd.f32 %v935, 1.0
  %v937 = vrcp.pop %v936
  %v938 = vmul.f32 1.0, %v937
  %v939 = vtanh.pop %v932
  %v940 = vmul.f32 %v938, %v847
  %942 = vrot.lane.b32.xlu0 %v939, 104
  %v943 = vpop.permute.xlu0 %942
  %v945 = vmul.f32 %v938, %v943
  %947 = vrot.lane.b32.xlu0 %v945, 8
  %v948 = vpop.permute.xlu0 %947
  %v950 = vadd.f32 %v940, %v948
  %v951 = vtanh.pop %v950
  %953 = vrot.lane.b32.xlu0 %v951, 8
  %v954 = vpop.permute.xlu0 %953
  %v956 = vmul.f32 %v938, %v954
  %958 = vrot.lane.b32.xlu0 %v956, 112
  %v959 = vpop.permute.xlu0 %958
  %961 = vst.msk [vmem:[#allocation3 + $0x7] sm:$0x1] %vm239, %v959
  %v962 = vld [vmem:[#allocation2 + $0x8] sm:$0x1]
  %v963 = vsel %vm41, %v959, 0
  %965 = vmatprep.subr.mxu0 0.0
  %966 = vmatpush1.msra.mxu0 %v29
  %967 = vmatprep.subr.mxu0 0.0
  %968 = vmatpush1.msra.mxu0 0.0
  %969 = vmatprep.subr.mxu0 0.0
  %970 = vmatpush1.msra.mxu0 0.0
  %971 = vmatprep.subr.mxu0 0.0
  %972 = vmatpush1.msra.mxu0 0.0
  %973 = vmatprep.subr.mxu0 0.0
  %974 = vmatpush1.msra.mxu0 0.0
  %975 = vmatprep.subr.mxu0 0.0
  %976 = vmatpush1.msra.mxu0 0.0
  %977 = vmatprep.subr.mxu0 0.0
  %978 = vmatpush1.msra.mxu0 0.0
  %979 = vmatprep.subr.mxu0 0.0
  %980 = vmatpush1.msra.mxu0 0.0
  %981 = vmatprep.subr.mxu0 0.0
  %982 = vmatpush1.msra.mxu0 0.0
  %983 = vmatprep.subr.mxu0 0.0
  %984 = vmatpush1.msra.mxu0 0.0
  %985 = vmatprep.subr.mxu0 0.0
  %986 = vmatpush1.msra.mxu0 0.0
  %987 = vmatprep.subr.mxu0 0.0
  %988 = vmatpush1.msra.mxu0 0.0
  %989 = vmatprep.subr.mxu0 0.0
  %990 = vmatpush1.msra.mxu0 0.0
  %991 = vmatprep.subr.mxu0 0.0
  %992 = vmatpush1.msra.mxu0 0.0
  %993 = vmatprep.subr.mxu0 0.0
  %994 = vmatpush1.msra.mxu0 0.0
  %995 = vmatprep.subr.mxu0 0.0
  %996 = vmatpush1.msra.mxu0 0.0
  %997 = vmatprep.subr.mxu0 0.0
  %998 = vmatpush1.msra.mxu0 0.0
  %999 = vmatprep.subr.mxu0 0.0
  %1000 = vmatpush1.msra.mxu0 0.0
  %1001 = vmatprep.subr.mxu0 0.0
  %1002 = vmatpush1.msra.mxu0 0.0
  %1003 = vmatprep.subr.mxu0 0.0
  %1004 = vmatpush1.msra.mxu0 0.0
  %1005 = vmatprep.subr.mxu0 0.0
  %1006 = vmatpush1.msra.mxu0 0.0
  %1007 = vmatprep.subr.mxu0 0.0
  %1008 = vmatpush1.msra.mxu0 0.0
  %1009 = vmatprep.subr.mxu0 0.0
  %1010 = vmatpush1.msra.mxu0 0.0
  %1011 = vmatprep.subr.mxu0 0.0
  %1012 = vmatpush1.msra.mxu0 0.0
  %1013 = vmatprep.subr.mxu0 0.0
  %1014 = vmatpush1.msra.mxu0 0.0
  %1015 = vmatprep.subr.mxu0 0.0
  %1016 = vmatpush1.msra.mxu0 0.0
  %1017 = vmatprep.subr.mxu0 0.0
  %1018 = vmatpush1.msra.mxu0 0.0
  %1019 = vmatprep.subr.mxu0 0.0
  %1020 = vmatpush1.msra.mxu0 0.0
  %1021 = vmatprep.subr.mxu0 0.0
  %1022 = vmatpush1.msra.mxu0 0.0
  %1023 = vmatprep.subr.mxu0 0.0
  %1024 = vmatpush1.msra.mxu0 0.0
  %1025 = vmatprep.subr.mxu0 0.0
  %1026 = vmatpush1.msra.mxu0 0.0
  %1027 = vmatprep.subr.mxu0 0.0
  %1028 = vmatpush1.msra.mxu0 0.0
  %1029 = vmatprep.mubr.f32.mxu0 0.0
  %1030 = vmatmul.mubr.f32.gmra.mrb[0].mxu0 %v963
  %v1031 = vpop.f32.mrb[0].mxu0
  %v1032 = vadd.f32 0.0, %v1031
  %v1033 = vpop.f32.mrb[0].mxu0
  %1034 = vdwg.mxu0
  %v1035 = vadd.f32 %v962, %v1032
  %v1036 = vxor.u32 %v1035, 2147483648
  %v1037 = vmul.f32 %v1036, 1.442695
  %v1038 = vpow.pop %v1037
  %v1039 = vadd.f32 %v1038, 1.0
  %v1040 = vrcp.pop %v1039
  %v1041 = vmul.f32 1.0, %v1040
  %v1042 = vtanh.pop %v1035
  %v1043 = vmul.f32 %v1041, %v950
  %1045 = vrot.lane.b32.xlu0 %v1042, 104
  %v1046 = vpop.permute.xlu0 %1045
  %v1048 = vmul.f32 %v1041, %v1046
  %1050 = vrot.lane.b32.xlu0 %v1048, 8
  %v1051 = vpop.permute.xlu0 %1050
  %v1053 = vadd.f32 %v1043, %v1051
  %v1054 = vtanh.pop %v1053
  %1056 = vrot.lane.b32.xlu0 %v1054, 8
  %v1057 = vpop.permute.xlu0 %1056
  %v1059 = vmul.f32 %v1041, %v1057
  %1061 = vrot.lane.b32.xlu0 %v1059, 112
  %v1062 = vpop.permute.xlu0 %1061
  %1064 = vst.msk [vmem:[#allocation3 + $0x8] sm:$0x1] %vm239, %v1062
  %v1065 = vld [vmem:[#allocation2 + $0x9] sm:$0x1]
  %v1066 = vsel %vm41, %v1062, 0
  %1068 = vmatprep.subr.mxu0 0.0
  %1069 = vmatpush1.msra.mxu0 %v29
  %1070 = vmatprep.subr.mxu0 0.0
  %1071 = vmatpush1.msra.mxu0 0.0
  %1072 = vmatprep.subr.mxu0 0.0
  %1073 = vmatpush1.msra.mxu0 0.0
  %1074 = vmatprep.subr.mxu0 0.0
  %1075 = vmatpush1.msra.mxu0 0.0
  %1076 = vmatprep.subr.mxu0 0.0
  %1077 = vmatpush1.msra.mxu0 0.0
  %1078 = vmatprep.subr.mxu0 0.0
  %1079 = vmatpush1.msra.mxu0 0.0
  %1080 = vmatprep.subr.mxu0 0.0
  %1081 = vmatpush1.msra.mxu0 0.0
  %1082 = vmatprep.subr.mxu0 0.0
  %1083 = vmatpush1.msra.mxu0 0.0
  %1084 = vmatprep.subr.mxu0 0.0
  %1085 = vmatpush1.msra.mxu0 0.0
  %1086 = vmatprep.subr.mxu0 0.0
  %1087 = vmatpush1.msra.mxu0 0.0
  %1088 = vmatprep.subr.mxu0 0.0
  %1089 = vmatpush1.msra.mxu0 0.0
  %1090 = vmatprep.subr.mxu0 0.0
  %1091 = vmatpush1.msra.mxu0 0.0
  %1092 = vmatprep.subr.mxu0 0.0
  %1093 = vmatpush1.msra.mxu0 0.0
  %1094 = vmatprep.subr.mxu0 0.0
  %1095 = vmatpush1.msra.mxu0 0.0
  %1096 = vmatprep.subr.mxu0 0.0
  %1097 = vmatpush1.msra.mxu0 0.0
  %1098 = vmatprep.subr.mxu0 0.0
  %1099 = vmatpush1.msra.mxu0 0.0
  %1100 = vmatprep.subr.mxu0 0.0
  %1101 = vmatpush1.msra.mxu0 0.0
  %1102 = vmatprep.subr.mxu0 0.0
  %1103 = vmatpush1.msra.mxu0 0.0
  %1104 = vmatprep.subr.mxu0 0.0
  %1105 = vmatpush1.msra.mxu0 0.0
  %1106 = vmatprep.subr.mxu0 0.0
  %1107 = vmatpush1.msra.mxu0 0.0
  %1108 = vmatprep.subr.mxu0 0.0
  %1109 = vmatpush1.msra.mxu0 0.0
  %1110 = vmatprep.subr.mxu0 0.0
  %1111 = vmatpush1.msra.mxu0 0.0
  %1112 = vmatprep.subr.mxu0 0.0
  %1113 = vmatpush1.msra.mxu0 0.0
  %1114 = vmatprep.subr.mxu0 0.0
  %1115 = vmatpush1.msra.mxu0 0.0
  %1116 = vmatprep.subr.mxu0 0.0
  %1117 = vmatpush1.msra.mxu0 0.0
  %1118 = vmatprep.subr.mxu0 0.0
  %1119 = vmatpush1.msra.mxu0 0.0
  %1120 = vmatprep.subr.mxu0 0.0
  %1121 = vmatpush1.msra.mxu0 0.0
  %1122 = vmatprep.subr.mxu0 0.0
  %1123 = vmatpush1.msra.mxu0 0.0
  %1124 = vmatprep.subr.mxu0 0.0
  %1125 = vmatpush1.msra.mxu0 0.0
  %1126 = vmatprep.subr.mxu0 0.0
  %1127 = vmatpush1.msra.mxu0 0.0
  %1128 = vmatprep.subr.mxu0 0.0
  %1129 = vmatpush1.msra.mxu0 0.0
  %1130 = vmatprep.subr.mxu0 0.0
  %1131 = vmatpush1.msra.mxu0 0.0
  %1132 = vmatprep.mubr.f32.mxu0 0.0
  %1133 = vmatmul.mubr.f32.gmra.mrb[0].mxu0 %v1066
  %v1134 = vpop.f32.mrb[0].mxu0
  %v1135 = vadd.f32 0.0, %v1134
  %v1136 = vpop.f32.mrb[0].mxu0
  %1137 = vdwg.mxu0
  %v1138 = vadd.f32 %v1065, %v1135
  %v1139 = vxor.u32 %v1138, 2147483648
  %v1140 = vmul.f32 %v1139, 1.442695
  %v1141 = vpow.pop %v1140
  %v1142 = vadd.f32 %v1141, 1.0
  %v1143 = vrcp.pop %v1142
  %v1144 = vmul.f32 1.0, %v1143
  %v1145 = vtanh.pop %v1138
  %v1146 = vmul.f32 %v1144, %v1053
  %1148 = vrot.lane.b32.xlu0 %v1145, 104
  %v1149 = vpop.permute.xlu0 %1148
  %v1151 = vmul.f32 %v1144, %v1149
  %1153 = vrot.lane.b32.xlu0 %v1151, 8
  %v1154 = vpop.permute.xlu0 %1153
  %v1156 = vadd.f32 %v1146, %v1154
  %v1157 = vtanh.pop %v1156
  %1159 = vrot.lane.b32.xlu0 %v1157, 8
  %v1160 = vpop.permute.xlu0 %1159
  %v1162 = vmul.f32 %v1144, %v1160
  %1164 = vrot.lane.b32.xlu0 %v1162, 112
  %v1165 = vpop.permute.xlu0 %1164
  %1167 = vst.msk [vmem:[#allocation3 + $0x9] sm:$0x1] %vm239, %v1165
  %v1168 = vld [vmem:[#allocation2 + $0xa] sm:$0x1]
  %v1169 = vsel %vm41, %v1165, 0
  %1171 = vmatprep.subr.mxu0 0.0
  %1172 = vmatpush1.msra.mxu0 %v29
  %1173 = vmatprep.subr.mxu0 0.0
  %1174 = vmatpush1.msra.mxu0 0.0
  %1175 = vmatprep.subr.mxu0 0.0
  %1176 = vmatpush1.msra.mxu0 0.0
  %1177 = vmatprep.subr.mxu0 0.0
  %1178 = vmatpush1.msra.mxu0 0.0
  %1179 = vmatprep.subr.mxu0 0.0
  %1180 = vmatpush1.msra.mxu0 0.0
  %1181 = vmatprep.subr.mxu0 0.0
  %1182 = vmatpush1.msra.mxu0 0.0
  %1183 = vmatprep.subr.mxu0 0.0
  %1184 = vmatpush1.msra.mxu0 0.0
  %1185 = vmatprep.subr.mxu0 0.0
  %1186 = vmatpush1.msra.mxu0 0.0
  %1187 = vmatprep.subr.mxu0 0.0
  %1188 = vmatpush1.msra.mxu0 0.0
  %1189 = vmatprep.subr.mxu0 0.0
  %1190 = vmatpush1.msra.mxu0 0.0
  %1191 = vmatprep.subr.mxu0 0.0
  %1192 = vmatpush1.msra.mxu0 0.0
  %1193 = vmatprep.subr.mxu0 0.0
  %1194 = vmatpush1.msra.mxu0 0.0
  %1195 = vmatprep.subr.mxu0 0.0
  %1196 = vmatpush1.msra.mxu0 0.0
  %1197 = vmatprep.subr.mxu0 0.0
  %1198 = vmatpush1.msra.mxu0 0.0
  %1199 = vmatprep.subr.mxu0 0.0
  %1200 = vmatpush1.msra.mxu0 0.0
  %1201 = vmatprep.subr.mxu0 0.0
  %1202 = vmatpush1.msra.mxu0 0.0
  %1203 = vmatprep.subr.mxu0 0.0
  %1204 = vmatpush1.msra.mxu0 0.0
  %1205 = vmatprep.subr.mxu0 0.0
  %1206 = vmatpush1.msra.mxu0 0.0
  %1207 = vmatprep.subr.mxu0 0.0
  %1208 = vmatpush1.msra.mxu0 0.0
  %1209 = vmatprep.subr.mxu0 0.0
  %1210 = vmatpush1.msra.mxu0 0.0
  %1211 = vmatprep.subr.mxu0 0.0
  %1212 = vmatpush1.msra.mxu0 0.0
  %1213 = vmatprep.subr.mxu0 0.0
  %1214 = vmatpush1.msra.mxu0 0.0
  %1215 = vmatprep.subr.mxu0 0.0
  %1216 = vmatpush1.msra.mxu0 0.0
  %1217 = vmatprep.subr.mxu0 0.0
  %1218 = vmatpush1.msra.mxu0 0.0
  %1219 = vmatprep.subr.mxu0 0.0
  %1220 = vmatpush1.msra.mxu0 0.0
  %1221 = vmatprep.subr.mxu0 0.0
  %1222 = vmatpush1.msra.mxu0 0.0
  %1223 = vmatprep.subr.mxu0 0.0
  %1224 = vmatpush1.msra.mxu0 0.0
  %1225 = vmatprep.subr.mxu0 0.0
  %1226 = vmatpush1.msra.mxu0 0.0
  %1227 = vmatprep.subr.mxu0 0.0
  %1228 = vmatpush1.msra.mxu0 0.0
  %1229 = vmatprep.subr.mxu0 0.0
  %1230 = vmatpush1.msra.mxu0 0.0
  %1231 = vmatprep.subr.mxu0 0.0
  %1232 = vmatpush1.msra.mxu0 0.0
  %1233 = vmatprep.subr.mxu0 0.0
  %1234 = vmatpush1.msra.mxu0 0.0
  %1235 = vmatprep.mubr.f32.mxu0 0.0
  %1236 = vmatmul.mubr.f32.gmra.mrb[0].mxu0 %v1169
  %v1237 = vpop.f32.mrb[0].mxu0
  %v1238 = vadd.f32 0.0, %v1237
  %v1239 = vpop.f32.mrb[0].mxu0
  %1240 = vdwg.mxu0
  %v1241 = vadd.f32 %v1168, %v1238
  %v1242 = vxor.u32 %v1241, 2147483648
  %v1243 = vmul.f32 %v1242, 1.442695
  %v1244 = vpow.pop %v1243
  %v1245 = vadd.f32 %v1244, 1.0
  %v1246 = vrcp.pop %v1245
  %v1247 = vmul.f32 1.0, %v1246
  %v1248 = vtanh.pop %v1241
  %v1249 = vmul.f32 %v1247, %v1156
  %1251 = vrot.lane.b32.xlu0 %v1248, 104
  %v1252 = vpop.permute.xlu0 %1251
  %v1254 = vmul.f32 %v1247, %v1252
  %1256 = vrot.lane.b32.xlu0 %v1254, 8
  %v1257 = vpop.permute.xlu0 %1256
  %v1259 = vadd.f32 %v1249, %v1257
  %v1260 = vtanh.pop %v1259
  %1262 = vrot.lane.b32.xlu0 %v1260, 8
  %v1263 = vpop.permute.xlu0 %1262
  %v1265 = vmul.f32 %v1247, %v1263
  %1267 = vrot.lane.b32.xlu0 %v1265, 112
  %v1268 = vpop.permute.xlu0 %1267
  %1270 = vst.msk [vmem:[#allocation3 + $0xa] sm:$0x1] %vm239, %v1268
  %v1271 = vld [vmem:[#allocation2 + $0xb] sm:$0x1]
  %v1272 = vsel %vm41, %v1268, 0
  %1274 = vmatprep.subr.mxu0 0.0
  %1275 = vmatpush1.msra.mxu0 %v29
  %1276 = vmatprep.subr.mxu0 0.0
  %1277 = vmatpush1.msra.mxu0 0.0
  %1278 = vmatprep.subr.mxu0 0.0
  %1279 = vmatpush1.msra.mxu0 0.0
  %1280 = vmatprep.subr.mxu0 0.0
  %1281 = vmatpush1.msra.mxu0 0.0
  %1282 = vmatprep.subr.mxu0 0.0
  %1283 = vmatpush1.msra.mxu0 0.0
  %1284 = vmatprep.subr.mxu0 0.0
  %1285 = vmatpush1.msra.mxu0 0.0
  %1286 = vmatprep.subr.mxu0 0.0
  %1287 = vmatpush1.msra.mxu0 0.0
  %1288 = vmatprep.subr.mxu0 0.0
  %1289 = vmatpush1.msra.mxu0 0.0
  %1290 = vmatprep.subr.mxu0 0.0
  %1291 = vmatpush1.msra.mxu0 0.0
  %1292 = vmatprep.subr.mxu0 0.0
  %1293 = vmatpush1.msra.mxu0 0.0
  %1294 = vmatprep.subr.mxu0 0.0
  %1295 = vmatpush1.msra.mxu0 0.0
  %1296 = vmatprep.subr.mxu0 0.0
  %1297 = vmatpush1.msra.mxu0 0.0
  %1298 = vmatprep.subr.mxu0 0.0
  %1299 = vmatpush1.msra.mxu0 0.0
  %1300 = vmatprep.subr.mxu0 0.0
  %1301 = vmatpush1.msra.mxu0 0.0
  %1302 = vmatprep.subr.mxu0 0.0
  %1303 = vmatpush1.msra.mxu0 0.0
  %1304 = vmatprep.subr.mxu0 0.0
  %1305 = vmatpush1.msra.mxu0 0.0
  %1306 = vmatprep.subr.mxu0 0.0
  %1307 = vmatpush1.msra.mxu0 0.0
  %1308 = vmatprep.subr.mxu0 0.0
  %1309 = vmatpush1.msra.mxu0 0.0
  %1310 = vmatprep.subr.mxu0 0.0
  %1311 = vmatpush1.msra.mxu0 0.0
  %1312 = vmatprep.subr.mxu0 0.0
  %1313 = vmatpush1.msra.mxu0 0.0
  %1314 = vmatprep.subr.mxu0 0.0
  %1315 = vmatpush1.msra.mxu0 0.0
  %1316 = vmatprep.subr.mxu0 0.0
  %1317 = vmatpush1.msra.mxu0 0.0
  %1318 = vmatprep.subr.mxu0 0.0
  %1319 = vmatpush1.msra.mxu0 0.0
  %1320 = vmatprep.subr.mxu0 0.0
  %1321 = vmatpush1.msra.mxu0 0.0
  %1322 = vmatprep.subr.mxu0 0.0
  %1323 = vmatpush1.msra.mxu0 0.0
  %1324 = vmatprep.subr.mxu0 0.0
  %1325 = vmatpush1.msra.mxu0 0.0
  %1326 = vmatprep.subr.mxu0 0.0
  %1327 = vmatpush1.msra.mxu0 0.0
  %1328 = vmatprep.subr.mxu0 0.0
  %1329 = vmatpush1.msra.mxu0 0.0
  %1330 = vmatprep.subr.mxu0 0.0
  %1331 = vmatpush1.msra.mxu0 0.0
  %1332 = vmatprep.subr.mxu0 0.0
  %1333 = vmatpush1.msra.mxu0 0.0
  %1334 = vmatprep.subr.mxu0 0.0
  %1335 = vmatpush1.msra.mxu0 0.0
  %1336 = vmatprep.subr.mxu0 0.0
  %1337 = vmatpush1.msra.mxu0 0.0
  %1338 = vmatprep.mubr.f32.mxu0 0.0
  %1339 = vmatmul.mubr.f32.gmra.mrb[0].mxu0 %v1272
  %v1340 = vpop.f32.mrb[0].mxu0
  %v1341 = vadd.f32 0.0, %v1340
  %v1342 = vpop.f32.mrb[0].mxu0
  %1343 = vdwg.mxu0
  %v1344 = vadd.f32 %v1271, %v1341
  %v1345 = vxor.u32 %v1344, 2147483648
  %v1346 = vmul.f32 %v1345, 1.442695
  %v1347 = vpow.pop %v1346
  %v1348 = vadd.f32 %v1347, 1.0
  %v1349 = vrcp.pop %v1348
  %v1350 = vmul.f32 1.0, %v1349
  %v1351 = vtanh.pop %v1344
  %v1352 = vmul.f32 %v1350, %v1259
  %1354 = vrot.lane.b32.xlu0 %v1351, 104
  %v1355 = vpop.permute.xlu0 %1354
  %v1357 = vmul.f32 %v1350, %v1355
  %1359 = vrot.lane.b32.xlu0 %v1357, 8
  %v1360 = vpop.permute.xlu0 %1359
  %v1362 = vadd.f32 %v1352, %v1360
  %v1363 = vtanh.pop %v1362
  %1365 = vrot.lane.b32.xlu0 %v1363, 8
  %v1366 = vpop.permute.xlu0 %1365
  %v1368 = vmul.f32 %v1350, %v1366
  %1370 = vrot.lane.b32.xlu0 %v1368, 112
  %v1371 = vpop.permute.xlu0 %1370
  %1373 = vst.msk [vmem:[#allocation3 + $0xb] sm:$0x1] %vm239, %v1371
  %v1374 = vld [vmem:[#allocation2 + $0xc] sm:$0x1]
  %v1375 = vsel %vm41, %v1371, 0
  %1377 = vmatprep.subr.mxu0 0.0
  %1378 = vmatpush1.msra.mxu0 %v29
  %1379 = vmatprep.subr.mxu0 0.0
  %1380 = vmatpush1.msra.mxu0 0.0
  %1381 = vmatprep.subr.mxu0 0.0
  %1382 = vmatpush1.msra.mxu0 0.0
  %1383 = vmatprep.subr.mxu0 0.0
  %1384 = vmatpush1.msra.mxu0 0.0
  %1385 = vmatprep.subr.mxu0 0.0
  %1386 = vmatpush1.msra.mxu0 0.0
  %1387 = vmatprep.subr.mxu0 0.0
  %1388 = vmatpush1.msra.mxu0 0.0
  %1389 = vmatprep.subr.mxu0 0.0
  %1390 = vmatpush1.msra.mxu0 0.0
  %1391 = vmatprep.subr.mxu0 0.0
  %1392 = vmatpush1.msra.mxu0 0.0
  %1393 = vmatprep.subr.mxu0 0.0
  %1394 = vmatpush1.msra.mxu0 0.0
  %1395 = vmatprep.subr.mxu0 0.0
  %1396 = vmatpush1.msra.mxu0 0.0
  %1397 = vmatprep.subr.mxu0 0.0
  %1398 = vmatpush1.msra.mxu0 0.0
  %1399 = vmatprep.subr.mxu0 0.0
  %1400 = vmatpush1.msra.mxu0 0.0
  %1401 = vmatprep.subr.mxu0 0.0
  %1402 = vmatpush1.msra.mxu0 0.0
  %1403 = vmatprep.subr.mxu0 0.0
  %1404 = vmatpush1.msra.mxu0 0.0
  %1405 = vmatprep.subr.mxu0 0.0
  %1406 = vmatpush1.msra.mxu0 0.0
  %1407 = vmatprep.subr.mxu0 0.0
  %1408 = vmatpush1.msra.mxu0 0.0
  %1409 = vmatprep.subr.mxu0 0.0
  %1410 = vmatpush1.msra.mxu0 0.0
  %1411 = vmatprep.subr.mxu0 0.0
  %1412 = vmatpush1.msra.mxu0 0.0
  %1413 = vmatprep.subr.mxu0 0.0
  %1414 = vmatpush1.msra.mxu0 0.0
  %1415 = vmatprep.subr.mxu0 0.0
  %1416 = vmatpush1.msra.mxu0 0.0
  %1417 = vmatprep.subr.mxu0 0.0
  %1418 = vmatpush1.msra.mxu0 0.0
  %1419 = vmatprep.subr.mxu0 0.0
  %1420 = vmatpush1.msra.mxu0 0.0
  %1421 = vmatprep.subr.mxu0 0.0
  %1422 = vmatpush1.msra.mxu0 0.0
  %1423 = vmatprep.subr.mxu0 0.0
  %1424 = vmatpush1.msra.mxu0 0.0
  %1425 = vmatprep.subr.mxu0 0.0
  %1426 = vmatpush1.msra.mxu0 0.0
  %1427 = vmatprep.subr.mxu0 0.0
  %1428 = vmatpush1.msra.mxu0 0.0
  %1429 = vmatprep.subr.mxu0 0.0
  %1430 = vmatpush1.msra.mxu0 0.0
  %1431 = vmatprep.subr.mxu0 0.0
  %1432 = vmatpush1.msra.mxu0 0.0
  %1433 = vmatprep.subr.mxu0 0.0
  %1434 = vmatpush1.msra.mxu0 0.0
  %1435 = vmatprep.subr.mxu0 0.0
  %1436 = vmatpush1.msra.mxu0 0.0
  %1437 = vmatprep.subr.mxu0 0.0
  %1438 = vmatpush1.msra.mxu0 0.0
  %1439 = vmatprep.subr.mxu0 0.0
  %1440 = vmatpush1.msra.mxu0 0.0
  %1441 = vmatprep.mubr.f32.mxu0 0.0
  %1442 = vmatmul.mubr.f32.gmra.mrb[0].mxu0 %v1375
  %v1443 = vpop.f32.mrb[0].mxu0
  %v1444 = vadd.f32 0.0, %v1443
  %v1445 = vpop.f32.mrb[0].mxu0
  %1446 = vdwg.mxu0
  %v1447 = vadd.f32 %v1374, %v1444
  %v1448 = vxor.u32 %v1447, 2147483648
  %v1449 = vmul.f32 %v1448, 1.442695
  %v1450 = vpow.pop %v1449
  %v1451 = vadd.f32 %v1450, 1.0
  %v1452 = vrcp.pop %v1451
  %v1453 = vmul.f32 1.0, %v1452
  %v1454 = vtanh.pop %v1447
  %v1455 = vmul.f32 %v1453, %v1362
  %1457 = vrot.lane.b32.xlu0 %v1454, 104
  %v1458 = vpop.permute.xlu0 %1457
  %v1460 = vmul.f32 %v1453, %v1458
  %1462 = vrot.lane.b32.xlu0 %v1460, 8
  %v1463 = vpop.permute.xlu0 %1462
  %v1465 = vadd.f32 %v1455, %v1463
  %v1466 = vtanh.pop %v1465
  %1468 = vrot.lane.b32.xlu0 %v1466, 8
  %v1469 = vpop.permute.xlu0 %1468
  %v1471 = vmul.f32 %v1453, %v1469
  %1473 = vrot.lane.b32.xlu0 %v1471, 112
  %v1474 = vpop.permute.xlu0 %1473
  %1476 = vst.msk [vmem:[#allocation3 + $0xc] sm:$0x1] %vm239, %v1474
  %v1477 = vld [vmem:[#allocation2 + $0xd] sm:$0x1]
  %v1478 = vsel %vm41, %v1474, 0
  %1480 = vmatprep.subr.mxu0 0.0
  %1481 = vmatpush1.msra.mxu0 %v29
  %1482 = vmatprep.subr.mxu0 0.0
  %1483 = vmatpush1.msra.mxu0 0.0
  %1484 = vmatprep.subr.mxu0 0.0
  %1485 = vmatpush1.msra.mxu0 0.0
  %1486 = vmatprep.subr.mxu0 0.0
  %1487 = vmatpush1.msra.mxu0 0.0
  %1488 = vmatprep.subr.mxu0 0.0
  %1489 = vmatpush1.msra.mxu0 0.0
  %1490 = vmatprep.subr.mxu0 0.0
  %1491 = vmatpush1.msra.mxu0 0.0
  %1492 = vmatprep.subr.mxu0 0.0
  %1493 = vmatpush1.msra.mxu0 0.0
  %1494 = vmatprep.subr.mxu0 0.0
  %1495 = vmatpush1.msra.mxu0 0.0
  %1496 = vmatprep.subr.mxu0 0.0
  %1497 = vmatpush1.msra.mxu0 0.0
  %1498 = vmatprep.subr.mxu0 0.0
  %1499 = vmatpush1.msra.mxu0 0.0
  %1500 = vmatprep.subr.mxu0 0.0
  %1501 = vmatpush1.msra.mxu0 0.0
  %1502 = vmatprep.subr.mxu0 0.0
  %1503 = vmatpush1.msra.mxu0 0.0
  %1504 = vmatprep.subr.mxu0 0.0
  %1505 = vmatpush1.msra.mxu0 0.0
  %1506 = vmatprep.subr.mxu0 0.0
  %1507 = vmatpush1.msra.mxu0 0.0
  %1508 = vmatprep.subr.mxu0 0.0
  %1509 = vmatpush1.msra.mxu0 0.0
  %1510 = vmatprep.subr.mxu0 0.0
  %1511 = vmatpush1.msra.mxu0 0.0
  %1512 = vmatprep.subr.mxu0 0.0
  %1513 = vmatpush1.msra.mxu0 0.0
  %1514 = vmatprep.subr.mxu0 0.0
  %1515 = vmatpush1.msra.mxu0 0.0
  %1516 = vmatprep.subr.mxu0 0.0
  %1517 = vmatpush1.msra.mxu0 0.0
  %1518 = vmatprep.subr.mxu0 0.0
  %1519 = vmatpush1.msra.mxu0 0.0
  %1520 = vmatprep.subr.mxu0 0.0
  %1521 = vmatpush1.msra.mxu0 0.0
  %1522 = vmatprep.subr.mxu0 0.0
  %1523 = vmatpush1.msra.mxu0 0.0
  %1524 = vmatprep.subr.mxu0 0.0
  %1525 = vmatpush1.msra.mxu0 0.0
  %1526 = vmatprep.subr.mxu0 0.0
  %1527 = vmatpush1.msra.mxu0 0.0
  %1528 = vmatprep.subr.mxu0 0.0
  %1529 = vmatpush1.msra.mxu0 0.0
  %1530 = vmatprep.subr.mxu0 0.0
  %1531 = vmatpush1.msra.mxu0 0.0
  %1532 = vmatprep.subr.mxu0 0.0
  %1533 = vmatpush1.msra.mxu0 0.0
  %1534 = vmatprep.subr.mxu0 0.0
  %1535 = vmatpush1.msra.mxu0 0.0
  %1536 = vmatprep.subr.mxu0 0.0
  %1537 = vmatpush1.msra.mxu0 0.0
  %1538 = vmatprep.subr.mxu0 0.0
  %1539 = vmatpush1.msra.mxu0 0.0
  %1540 = vmatprep.subr.mxu0 0.0
  %1541 = vmatpush1.msra.mxu0 0.0
  %1542 = vmatprep.subr.mxu0 0.0
  %1543 = vmatpush1.msra.mxu0 0.0
  %1544 = vmatprep.mubr.f32.mxu0 0.0
  %1545 = vmatmul.mubr.f32.gmra.mrb[0].mxu0 %v1478
  %v1546 = vpop.f32.mrb[0].mxu0
  %v1547 = vadd.f32 0.0, %v1546
  %v1548 = vpop.f32.mrb[0].mxu0
  %1549 = vdwg.mxu0
  %v1550 = vadd.f32 %v1477, %v1547
  %v1551 = vxor.u32 %v1550, 2147483648
  %v1552 = vmul.f32 %v1551, 1.442695
  %v1553 = vpow.pop %v1552
  %v1554 = vadd.f32 %v1553, 1.0
  %v1555 = vrcp.pop %v1554
  %v1556 = vmul.f32 1.0, %v1555
  %v1557 = vtanh.pop %v1550
  %v1558 = vmul.f32 %v1556, %v1465
  %1560 = vrot.lane.b32.xlu0 %v1557, 104
  %v1561 = vpop.permute.xlu0 %1560
  %v1563 = vmul.f32 %v1556, %v1561
  %1565 = vrot.lane.b32.xlu0 %v1563, 8
  %v1566 = vpop.permute.xlu0 %1565
  %v1568 = vadd.f32 %v1558, %v1566
  %v1569 = vtanh.pop %v1568
  %1571 = vrot.lane.b32.xlu0 %v1569, 8
  %v1572 = vpop.permute.xlu0 %1571
  %v1574 = vmul.f32 %v1556, %v1572
  %1576 = vrot.lane.b32.xlu0 %v1574, 112
  %v1577 = vpop.permute.xlu0 %1576
  %1579 = vst.msk [vmem:[#allocation3 + $0xd] sm:$0x1] %vm239, %v1577
  %v1580 = vld [vmem:[#allocation2 + $0xe] sm:$0x1]
  %v1581 = vsel %vm41, %v1577, 0
  %1583 = vmatprep.subr.mxu0 0.0
  %1584 = vmatpush1.msra.mxu0 %v29
  %1585 = vmatprep.subr.mxu0 0.0
  %1586 = vmatpush1.msra.mxu0 0.0
  %1587 = vmatprep.subr.mxu0 0.0
  %1588 = vmatpush1.msra.mxu0 0.0
  %1589 = vmatprep.subr.mxu0 0.0
  %1590 = vmatpush1.msra.mxu0 0.0
  %1591 = vmatprep.subr.mxu0 0.0
  %1592 = vmatpush1.msra.mxu0 0.0
  %1593 = vmatprep.subr.mxu0 0.0
  %1594 = vmatpush1.msra.mxu0 0.0
  %1595 = vmatprep.subr.mxu0 0.0
  %1596 = vmatpush1.msra.mxu0 0.0
  %1597 = vmatprep.subr.mxu0 0.0
  %1598 = vmatpush1.msra.mxu0 0.0
  %1599 = vmatprep.subr.mxu0 0.0
  %1600 = vmatpush1.msra.mxu0 0.0
  %1601 = vmatprep.subr.mxu0 0.0
  %1602 = vmatpush1.msra.mxu0 0.0
  %1603 = vmatprep.subr.mxu0 0.0
  %1604 = vmatpush1.msra.mxu0 0.0
  %1605 = vmatprep.subr.mxu0 0.0
  %1606 = vmatpush1.msra.mxu0 0.0
  %1607 = vmatprep.subr.mxu0 0.0
  %1608 = vmatpush1.msra.mxu0 0.0
  %1609 = vmatprep.subr.mxu0 0.0
  %1610 = vmatpush1.msra.mxu0 0.0
  %1611 = vmatprep.subr.mxu0 0.0
  %1612 = vmatpush1.msra.mxu0 0.0
  %1613 = vmatprep.subr.mxu0 0.0
  %1614 = vmatpush1.msra.mxu0 0.0
  %1615 = vmatprep.subr.mxu0 0.0
  %1616 = vmatpush1.msra.mxu0 0.0
  %1617 = vmatprep.subr.mxu0 0.0
  %1618 = vmatpush1.msra.mxu0 0.0
  %1619 = vmatprep.subr.mxu0 0.0
  %1620 = vmatpush1.msra.mxu0 0.0
  %1621 = vmatprep.subr.mxu0 0.0
  %1622 = vmatpush1.msra.mxu0 0.0
  %1623 = vmatprep.subr.mxu0 0.0
  %1624 = vmatpush1.msra.mxu0 0.0
  %1625 = vmatprep.subr.mxu0 0.0
  %1626 = vmatpush1.msra.mxu0 0.0
  %1627 = vmatprep.subr.mxu0 0.0
  %1628 = vmatpush1.msra.mxu0 0.0
  %1629 = vmatprep.subr.mxu0 0.0
  %1630 = vmatpush1.msra.mxu0 0.0
  %1631 = vmatprep.subr.mxu0 0.0
  %1632 = vmatpush1.msra.mxu0 0.0
  %1633 = vmatprep.subr.mxu0 0.0
  %1634 = vmatpush1.msra.mxu0 0.0
  %1635 = vmatprep.subr.mxu0 0.0
  %1636 = vmatpush1.msra.mxu0 0.0
  %1637 = vmatprep.subr.mxu0 0.0
  %1638 = vmatpush1.msra.mxu0 0.0
  %1639 = vmatprep.subr.mxu0 0.0
  %1640 = vmatpush1.msra.mxu0 0.0
  %1641 = vmatprep.subr.mxu0 0.0
  %1642 = vmatpush1.msra.mxu0 0.0
  %1643 = vmatprep.subr.mxu0 0.0
  %1644 = vmatpush1.msra.mxu0 0.0
  %1645 = vmatprep.subr.mxu0 0.0
  %1646 = vmatpush1.msra.mxu0 0.0
  %1647 = vmatprep.mubr.f32.mxu0 0.0
  %1648 = vmatmul.mubr.f32.gmra.mrb[0].mxu0 %v1581
  %v1649 = vpop.f32.mrb[0].mxu0
  %v1650 = vadd.f32 0.0, %v1649
  %v1651 = vpop.f32.mrb[0].mxu0
  %1652 = vdwg.mxu0
  %v1653 = vadd.f32 %v1580, %v1650
  %v1654 = vxor.u32 %v1653, 2147483648
  %v1655 = vmul.f32 %v1654, 1.442695
  %v1656 = vpow.pop %v1655
  %v1657 = vadd.f32 %v1656, 1.0
  %v1658 = vrcp.pop %v1657
  %v1659 = vmul.f32 1.0, %v1658
  %v1660 = vtanh.pop %v1653
  %v1661 = vmul.f32 %v1659, %v1568
  %1663 = vrot.lane.b32.xlu0 %v1660, 104
  %v1664 = vpop.permute.xlu0 %1663
  %v1666 = vmul.f32 %v1659, %v1664
  %1668 = vrot.lane.b32.xlu0 %v1666, 8
  %v1669 = vpop.permute.xlu0 %1668
  %v1671 = vadd.f32 %v1661, %v1669
  %v1672 = vtanh.pop %v1671
  %1674 = vrot.lane.b32.xlu0 %v1672, 8
  %v1675 = vpop.permute.xlu0 %1674
  %v1677 = vmul.f32 %v1659, %v1675
  %1679 = vrot.lane.b32.xlu0 %v1677, 112
  %v1680 = vpop.permute.xlu0 %1679
  %1682 = vst.msk [vmem:[#allocation3 + $0xe] sm:$0x1] %vm239, %v1680
  %v1683 = vld [vmem:[#allocation2 + $0xf] sm:$0x1]
  %v1684 = vsel %vm41, %v1680, 0
  %1686 = vmatprep.subr.mxu0 0.0
  %1687 = vmatpush1.msra.mxu0 %v29
  %1688 = vmatprep.subr.mxu0 0.0
  %1689 = vmatpush1.msra.mxu0 0.0
  %1690 = vmatprep.subr.mxu0 0.0
  %1691 = vmatpush1.msra.mxu0 0.0
  %1692 = vmatprep.subr.mxu0 0.0
  %1693 = vmatpush1.msra.mxu0 0.0
  %1694 = vmatprep.subr.mxu0 0.0
  %1695 = vmatpush1.msra.mxu0 0.0
  %1696 = vmatprep.subr.mxu0 0.0
  %1697 = vmatpush1.msra.mxu0 0.0
  %1698 = vmatprep.subr.mxu0 0.0
  %1699 = vmatpush1.msra.mxu0 0.0
  %1700 = vmatprep.subr.mxu0 0.0
  %1701 = vmatpush1.msra.mxu0 0.0
  %1702 = vmatprep.subr.mxu0 0.0
  %1703 = vmatpush1.msra.mxu0 0.0
  %1704 = vmatprep.subr.mxu0 0.0
  %1705 = vmatpush1.msra.mxu0 0.0
  %1706 = vmatprep.subr.mxu0 0.0
  %1707 = vmatpush1.msra.mxu0 0.0
  %1708 = vmatprep.subr.mxu0 0.0
  %1709 = vmatpush1.msra.mxu0 0.0
  %1710 = vmatprep.subr.mxu0 0.0
  %1711 = vmatpush1.msra.mxu0 0.0
  %1712 = vmatprep.subr.mxu0 0.0
  %1713 = vmatpush1.msra.mxu0 0.0
  %1714 = vmatprep.subr.mxu0 0.0
  %1715 = vmatpush1.msra.mxu0 0.0
  %1716 = vmatprep.subr.mxu0 0.0
  %1717 = vmatpush1.msra.mxu0 0.0
  %1718 = vmatprep.subr.mxu0 0.0
  %1719 = vmatpush1.msra.mxu0 0.0
  %1720 = vmatprep.subr.mxu0 0.0
  %1721 = vmatpush1.msra.mxu0 0.0
  %1722 = vmatprep.subr.mxu0 0.0
  %1723 = vmatpush1.msra.mxu0 0.0
  %1724 = vmatprep.subr.mxu0 0.0
  %1725 = vmatpush1.msra.mxu0 0.0
  %1726 = vmatprep.subr.mxu0 0.0
  %1727 = vmatpush1.msra.mxu0 0.0
  %1728 = vmatprep.subr.mxu0 0.0
  %1729 = vmatpush1.msra.mxu0 0.0
  %1730 = vmatprep.subr.mxu0 0.0
  %1731 = vmatpush1.msra.mxu0 0.0
  %1732 = vmatprep.subr.mxu0 0.0
  %1733 = vmatpush1.msra.mxu0 0.0
  %1734 = vmatprep.subr.mxu0 0.0
  %1735 = vmatpush1.msra.mxu0 0.0
  %1736 = vmatprep.subr.mxu0 0.0
  %1737 = vmatpush1.msra.mxu0 0.0
  %1738 = vmatprep.subr.mxu0 0.0
  %1739 = vmatpush1.msra.mxu0 0.0
  %1740 = vmatprep.subr.mxu0 0.0
  %1741 = vmatpush1.msra.mxu0 0.0
  %1742 = vmatprep.subr.mxu0 0.0
  %1743 = vmatpush1.msra.mxu0 0.0
  %1744 = vmatprep.subr.mxu0 0.0
  %1745 = vmatpush1.msra.mxu0 0.0
  %1746 = vmatprep.subr.mxu0 0.0
  %1747 = vmatpush1.msra.mxu0 0.0
  %1748 = vmatprep.subr.mxu0 0.0
  %1749 = vmatpush1.msra.mxu0 0.0
  %1750 = vmatprep.mubr.f32.mxu0 0.0
  %1751 = vmatmul.mubr.f32.gmra.mrb[0].mxu0 %v1684
  %v1752 = vpop.f32.mrb[0].mxu0
  %v1753 = vadd.f32 0.0, %v1752
  %v1754 = vpop.f32.mrb[0].mxu0
  %1755 = vdwg.mxu0
  %v1756 = vadd.f32 %v1683, %v1753
  %v1757 = vxor.u32 %v1756, 2147483648
  %v1758 = vmul.f32 %v1757, 1.442695
  %v1759 = vpow.pop %v1758
  %v1760 = vadd.f32 %v1759, 1.0
  %v1761 = vrcp.pop %v1760
  %v1762 = vmul.f32 1.0, %v1761
  %v1763 = vtanh.pop %v1756
  %v1764 = vmul.f32 %v1762, %v1671
  %1766 = vrot.lane.b32.xlu0 %v1763, 104
  %v1767 = vpop.permute.xlu0 %1766
  %v1769 = vmul.f32 %v1762, %v1767
  %1771 = vrot.lane.b32.xlu0 %v1769, 8
  %v1772 = vpop.permute.xlu0 %1771
  %v1774 = vadd.f32 %v1764, %v1772
  %v1775 = vtanh.pop %v1774
  %1777 = vrot.lane.b32.xlu0 %v1775, 8
  %v1778 = vpop.permute.xlu0 %1777
  %v1780 = vmul.f32 %v1762, %v1778
  %1782 = vrot.lane.b32.xlu0 %v1780, 112
  %v1783 = vpop.permute.xlu0 %1782
  %1785 = vst.msk [vmem:[#allocation3 + $0xf] sm:$0x1] %vm239, %v1783
  %v1786 = vld [vmem:[#allocation3] sm:$0xff]
  %v1787 = vld [vmem:[#allocation3 + $0x8] sm:$0xff]
  %v1788 = vld [vmem:[%s3] sm:$0xff]
  %v1790 = vlaneseq
  %v1791 = vshrl.u32 %v1790, 7
  %v1792 = vsub.s32 0, %v1791
  %v1793 = vrot.slane %v30, %v1792
  %v1796 = vsel %vm41, %v1786, 0
  %v1799 = vsel %vm41, %v1787, 0
  %1801 = vmatprep.subr.mxu0 0.0
  %1802 = vmatpush1.msra.mxu0 %v1788
  %1803 = vmatprep.subr.mxu0 0.0
  %1804 = vmatpush1.msra.mxu0 0.0
  %1805 = vmatprep.subr.mxu0 0.0
  %1806 = vmatpush1.msra.mxu0 0.0
  %1807 = vmatprep.subr.mxu0 0.0
  %1808 = vmatpush1.msra.mxu0 0.0
  %1809 = vmatprep.subr.mxu0 0.0
  %1810 = vmatpush1.msra.mxu0 0.0
  %1811 = vmatprep.subr.mxu0 0.0
  %1812 = vmatpush1.msra.mxu0 0.0
  %1813 = vmatprep.subr.mxu0 0.0
  %1814 = vmatpush1.msra.mxu0 0.0
  %1815 = vmatprep.subr.mxu0 0.0
  %1816 = vmatpush1.msra.mxu0 0.0
  %1817 = vmatprep.subr.mxu0 0.0
  %1818 = vmatpush1.msra.mxu0 0.0
  %1819 = vmatprep.subr.mxu0 0.0
  %1820 = vmatpush1.msra.mxu0 0.0
  %1821 = vmatprep.subr.mxu0 0.0
  %1822 = vmatpush1.msra.mxu0 0.0
  %1823 = vmatprep.subr.mxu0 0.0
  %1824 = vmatpush1.msra.mxu0 0.0
  %1825 = vmatprep.subr.mxu0 0.0
  %1826 = vmatpush1.msra.mxu0 0.0
  %1827 = vmatprep.subr.mxu0 0.0
  %1828 = vmatpush1.msra.mxu0 0.0
  %1829 = vmatprep.subr.mxu0 0.0
  %1830 = vmatpush1.msra.mxu0 0.0
  %1831 = vmatprep.subr.mxu0 0.0
  %1832 = vmatpush1.msra.mxu0 0.0
  %1833 = vmatprep.subr.mxu0 0.0
  %1834 = vmatpush1.msra.mxu0 0.0
  %1835 = vmatprep.subr.mxu0 0.0
  %1836 = vmatpush1.msra.mxu0 0.0
  %1837 = vmatprep.subr.mxu0 0.0
  %1838 = vmatpush1.msra.mxu0 0.0
  %1839 = vmatprep.subr.mxu0 0.0
  %1840 = vmatpush1.msra.mxu0 0.0
  %1841 = vmatprep.subr.mxu0 0.0
  %1842 = vmatpush1.msra.mxu0 0.0
  %1843 = vmatprep.subr.mxu0 0.0
  %1844 = vmatpush1.msra.mxu0 0.0
  %1845 = vmatprep.subr.mxu0 0.0
  %1846 = vmatpush1.msra.mxu0 0.0
  %1847 = vmatprep.subr.mxu0 0.0
  %1848 = vmatpush1.msra.mxu0 0.0
  %1849 = vmatprep.subr.mxu0 0.0
  %1850 = vmatpush1.msra.mxu0 0.0
  %1851 = vmatprep.subr.mxu0 0.0
  %1852 = vmatpush1.msra.mxu0 0.0
  %1853 = vmatprep.subr.mxu0 0.0
  %1854 = vmatpush1.msra.mxu0 0.0
  %1855 = vmatprep.subr.mxu0 0.0
  %1856 = vmatpush1.msra.mxu0 0.0
  %1857 = vmatprep.subr.mxu0 0.0
  %1858 = vmatpush1.msra.mxu0 0.0
  %1859 = vmatprep.subr.mxu0 0.0
  %1860 = vmatpush1.msra.mxu0 0.0
  %1861 = vmatprep.subr.mxu0 0.0
  %1862 = vmatpush1.msra.mxu0 0.0
  %1863 = vmatprep.subr.mxu0 0.0
  %1864 = vmatpush1.msra.mxu0 0.0
  %1865 = vmatprep.mubr.f32.mxu0 0.0
  %1866 = vmatmul.mubr.f32.gmra.mrb[0].mxu0 %v1796
  %v1867 = vpop.f32.mrb[0].mxu0
  %v1868 = vadd.f32 %v1793, %v1867
  %v1869 = vpop.f32.mrb[0].mxu0
  %1870 = vmatprep.mubr.f32.mxu0 0.0
  %1871 = vmatmul.mubr.f32.gmra.mrb[0].mxu0 %v1799
  %v1872 = vpop.f32.mrb[0].mxu0
  %v1873 = vadd.f32 %v1793, %v1872
  %v1874 = vpop.f32.mrb[0].mxu0
  %1875 = vdwg.mxu0
  %v1876 = vxor.u32 %v1868, 2147483648
  %v1877 = vxor.u32 %v1873, 2147483648
  %v1878 = vmul.f32 %v1876, 1.442695
  %v1879 = vpow.pop %v1878
  %v1880 = vmul.f32 %v1877, 1.442695
  %v1881 = vpow.pop %v1880
  %v1882 = vadd.f32 %v1879, 1.0
  %v1883 = vadd.f32 %v1881, 1.0
  %v1884 = vrcp.pop %v1882
  %v1885 = vmul.f32 1.0, %v1884
  %v1886 = vrcp.pop %v1883
  %v1887 = vmul.f32 1.0, %v1886
  %v1888 = vmul.f32 %v1885, 2.0
  %v1889 = vmul.f32 %v1887, 2.0
  %1890 = vst.msk [vmem:[%s8] sm:$0xff] %vm41, %v1888
  %1891 = vst.msk [vmem:[%s8 + $0x8] sm:$0xff] %vm41, %v1889
  // Predicated region
  $region34: #{tpu_custom_call.1} parent=0 // pred_check
    _
  $region35: #{tpu_custom_call.1} parent=0 // pred_check_branch
    %1893 = sbr.rel (0) target = $region37
  $region36: #{tpu_custom_call.1} parent=0 // pred_region
    _
  $region37: #{tpu_custom_call.1} parent=0 // pred_fallthru
    _
  // Predicated region
  $region38: #{tpu_custom_call.1} parent=0 // pred_check
    _
  $region39: #{tpu_custom_call.1} parent=0 // pred_check_branch
    %1895 = sbr.rel (0) target = $region41
  $region40: #{tpu_custom_call.1} parent=0 // pred_region
    _
  $region41: #{tpu_custom_call.1} parent=0 // pred_fallthru
    _

</llo_original>
